<compile_context>
chip_gen: v6e
topology: v6e:2x2x1
jax: 0.10.0
libtpu: 0.0.40
codegen_flags: <defaults>
</compile_context>

<pallas_src>
import functools
import math

import jax
import jax.numpy as jnp
from jax import lax
from jax.experimental import pallas as pl
from jax.experimental.pallas import tpu as pltpu


_LANE = 128                          # TPU lane width
_SINGLE_BUFFER_MIN_BYTES = 2 << 20   # resident operands >= this request pl.Buffered(1)


# ------------------------------ small helpers -------------------------------

def _nbytes(shape, dtype=jnp.float32):
    return math.prod(shape) * jnp.dtype(dtype).itemsize


def _round_up(x, m):
    return -(-x // m) * m


def _resident_spec(shape, dtype=jnp.float32):
    """BlockSpec for a grid-invariant (resident) operand.

    Large weights are requested single-buffered so the second pipeline buffer
    does not double their VMEM footprint (matters at production D/D_FF on
    v7x's 64 MiB); small operands keep the default path.
    """
    ndim = len(shape)
    index_map = lambda *_: (0,) * ndim
    if _nbytes(shape, dtype) >= _SINGLE_BUFFER_MIN_BYTES:
        try:
            return pl.BlockSpec(shape, index_map, pipeline_mode=pl.Buffered(1))
        except Exception:            # older jax without pipeline_mode support
            pass
    return pl.BlockSpec(shape, index_map)


def _resident_vmem_bytes(shape, dtype=jnp.float32):
    n = _nbytes(shape, dtype)
    return n if n >= _SINGLE_BUFFER_MIN_BYTES else 2 * n   # default is double-buffered


def _vmem_limit(working_set_bytes):
    """Scoped-VMEM request derived from the per-step working set.

    +4 MiB headroom for Mosaic internal scratch; clamped to [32, 48] MiB so it
    never exceeds v7x's 64 MiB physical VMEM yet never undercuts the default
    scoped limit.
    """
    return int(min(48 << 20, max(32 << 20, working_set_bytes + (4 << 20))))


def _unbiased_layernorm(x, gamma, beta, eps=1e-6):
    """torch-style LayerNorm of the reference: unbiased std (ddof=1)."""
    d = x.shape[-1]
    mean = jnp.mean(x, axis=-1, keepdims=True)
    diff = x - mean
    var = jnp.sum(diff * diff, axis=-1, keepdims=True) / (d - 1)
    return gamma * diff / (jnp.sqrt(var) + eps) + beta


# ----------------------------- Pallas kernels ------------------------------

def _attn_sublayer_kernel(x_ref, g_ref, b_ref, wqkv_ref, bqkv_ref, wo_ref,
                          bo_ref, o_ref, ctx_ref, *, num_heads, dh_pad):
    """x + MHA(LN(x)) for one batch element, fully fused in VMEM.

    Every head's Q/K/V occupies a 128-lane-aligned, zero-padded dh_pad-wide
    column block of the fused QKV activation (no vreg-crossing slices); each
    head's context is written into a lane-aligned slice of a (S, H*dh_pad)
    VMEM scratch and the output projection is ONE full-depth matmul.
    """
    x = x_ref[...].astype(jnp.float32)                     # (S, D)
    xn = _unbiased_layernorm(x, g_ref[...], b_ref[...])

    # Fused QKV projection; 1/sqrt(Dh) already folded into the Q weight/bias.
    qkv = jnp.dot(xn, wqkv_ref[...], preferred_element_type=jnp.float32)
    qkv = qkv + bqkv_ref[...]                              # (S, 3*H*dh_pad)

    hp = num_heads * dh_pad
    # TODO(synk): attention mask / dropout paths omitted (forward is exercised
    # with mask=None and dropout p=0.0, i.e. identity).
    for h in range(num_heads):
        lo = h * dh_pad                                    # 128-lane aligned
        q = qkv[:, lo:lo + dh_pad]
        k = qkv[:, hp + lo:hp + lo + dh_pad]
        v = qkv[:, 2 * hp + lo:2 * hp + lo + dh_pad]
        # scores = q @ k^T (contract last dims; zero-padded columns add 0).
        s = lax.dot_general(q, k, (((1,), (1,)), ((), ())),
                            preferred_element_type=jnp.float32)   # (S, S)
        s = s - jnp.max(s, axis=-1, keepdims=True)
        p = jnp.exp(s)
        # Exact reciprocal: approx=True (EUP slot) is cheaper but risks the
        # 1e-4 tolerance against the f32 reference.
        p = p * pl.reciprocal(jnp.sum(p, axis=-1, keepdims=True), approx=False)
        ctx_ref[:, lo:lo + dh_pad] = jnp.dot(p, v,
                                             preferred_element_type=jnp.float32)

    # Single full-depth output projection + bias + residual, lane-dense store.
    out = x + bo_ref[...] + jnp.dot(ctx_ref[...], wo_ref[...],
                                    preferred_element_type=jnp.float32)
    o_ref[...] = out.astype(o_ref.dtype)


def _ffn_sublayer_kernel(x_ref, g_ref, b_ref, w1_ref, b1_ref, w2_ref, b2_ref,
                         o_ref, xn_ref, acc_ref):
    """x + W2(relu(W1(LN(x)))) for one row tile, D_FF reduction grid-tiled.

    LN(x) is computed once per row tile (k == 0) into scratch; the (tm, tk)
    hidden activation never leaves VMEM; the (tm, D) accumulator carries the
    residual + b2 and is stored once on the last reduction step.
    """
    k = pl.program_id(1)

    @pl.when(k == 0)
    def _():
        x = x_ref[...].astype(jnp.float32)
        xn_ref[...] = _unbiased_layernorm(x, g_ref[...], b_ref[...])
        acc_ref[...] = x + b2_ref[...]                     # residual + linear2 bias

    h = jnp.dot(xn_ref[...], w1_ref[...], preferred_element_type=jnp.float32)
    h = jnp.maximum(h + b1_ref[...], 0.0)                  # (tm, tk) stays on-chip
    acc_ref[...] += jnp.dot(h, w2_ref[...], preferred_element_type=jnp.float32)

    @pl.when(k == pl.num_programs(1) - 1)
    def _():
        o_ref[...] = acc_ref[...].astype(o_ref.dtype)


# ------------------------------ wrappers ------------------------------------

def _row_tile(m, preferred=256):
    """Row-tile: multiple of 8 (f32 sublanes) dividing m, with >=2 grid steps
    when possible (pipelining + both v7x TensorCores)."""
    if m % 8:
        return m                       # fall back to a full-extent block
    cap = min(preferred, max(8, m // 2))
    tm = cap - cap % 8
    while tm >= 8:
        if m % tm == 0:
            return tm
        tm -= 8
    return m


def _ffn_k_tile(d_ff):
    """D_FF reduction tile: 256-aligned where possible (v6e/v7x MXU depth)."""
    for tk in (512, 256, 128):
        if d_ff % tk == 0:
            return tk
    return d_ff                        # tiny/odd D_FF: single reduction step


def attention_sublayer(x, ln_g, ln_b, wqkv, bqkv, wo, bo, num_heads, dh_pad):
    B, S, D = x.shape
    hp = num_heads * dh_pad
    hp3 = 3 * hp
    kernel = functools.partial(_attn_sublayer_kernel,
                               num_heads=num_heads, dh_pad=dh_pad)

    working_set = (
        2 * 2 * _nbytes((S, D))                              # pipelined x in + out blocks
        + _resident_vmem_bytes((D, hp3)) + _resident_vmem_bytes((1, hp3))
        + _resident_vmem_bytes((hp, D))
        + 3 * _resident_vmem_bytes((1, D))                   # ln gamma/beta, bo
        + _nbytes((S, hp))                                   # ctx scratch
        + _nbytes((S, hp3)) + 2 * _nbytes((S, S)))           # qkv / score live values

    return pl.pallas_call(
        kernel,
        grid=(B,),
        out_shape=jax.ShapeDtypeStruct((B, S, D), x.dtype),
        in_specs=[
            pl.BlockSpec((None, S, D), lambda b: (b, 0, 0)),   # squeezed batch dim
            _resident_spec((1, D)), _resident_spec((1, D)),    # LN1 gamma / beta
            _resident_spec((D, hp3)), _resident_spec((1, hp3)),  # fused padded QKV w / b
            _resident_spec((hp, D)), _resident_spec((1, D)),   # out-proj weight / bias
        ],
        out_specs=pl.BlockSpec((None, S, D), lambda b: (b, 0, 0)),
        scratch_shapes=[pltpu.VMEM((S, hp), jnp.float32)],     # per-head contexts
        compiler_params=pltpu.CompilerParams(
            dimension_semantics=("parallel",),
            vmem_limit_bytes=_vmem_limit(working_set)),
    )(x, ln_g.reshape(1, D), ln_b.reshape(1, D),
      wqkv, bqkv.reshape(1, hp3), wo, bo.reshape(1, D))


def ffn_sublayer(x2d, ln_g, ln_b, w1, b1, w2, b2):
    M, D = x2d.shape
    D_FF = w1.shape[1]
    tm = _row_tile(M)
    tk = _ffn_k_tile(D_FF)

    working_set = (
        2 * 2 * _nbytes((tm, D))                             # pipelined x in + out blocks
        + 2 * (_nbytes((D, tk)) + _nbytes((1, tk)) + _nbytes((tk, D)))  # streamed W1/b1/W2
        + 3 * _resident_vmem_bytes((1, D))                   # ln gamma/beta, b2
        + 2 * _nbytes((tm, D))                               # xn + acc scratch
        + _nbytes((tm, tk)))                                 # hidden activation live value

    return pl.pallas_call(
        _ffn_sublayer_kernel,
        grid=(M // tm, D_FF // tk),
        out_shape=jax.ShapeDtypeStruct((M, D), x2d.dtype),
        in_specs=[
            pl.BlockSpec((tm, D), lambda i, k: (i, 0)),
            _resident_spec((1, D)), _resident_spec((1, D)),  # LN2 gamma / beta
            pl.BlockSpec((D, tk), lambda i, k: (0, k)),      # W1 streamed by N blocks
            pl.BlockSpec((1, tk), lambda i, k: (0, k)),      # b1 blocks
            pl.BlockSpec((tk, D), lambda i, k: (k, 0)),      # W2 streamed by K blocks
            _resident_spec((1, D)),                          # b2
        ],
        out_specs=pl.BlockSpec((tm, D), lambda i, k: (i, 0)),
        scratch_shapes=[pltpu.VMEM((tm, D), jnp.float32),    # LN(x) cache
                        pltpu.VMEM((tm, D), jnp.float32)],   # accumulator
        compiler_params=pltpu.CompilerParams(
            dimension_semantics=("parallel", "arbitrary"),
            vmem_limit_bytes=_vmem_limit(working_set)),
    )(x2d, ln_g.reshape(1, D), ln_b.reshape(1, D),
      w1, b1.reshape(1, D_FF), w2, b2.reshape(1, D))


# --------------------------- parameter preparation ---------------------------

def prepare_encoder_params(p):
    """One-time parameter prep (hoisted out of the per-call forward):

      * fuse Wq/Wk/Wv into one (D, 3*H*Dh_pad) QKV weight,
      * zero-pad each head's Dh to a 128-lane-aligned Dh_pad (numerically exact:
        padded K/V/Wo entries contribute nothing),
      * fold 1/sqrt(Dh) into the Q weight/bias columns,
      * reshape the out-projection to (H*Dh_pad, D) with matching zero rows.
    """
    D = p["wq"].shape[0]
    H = p["h"]
    Dh = D // H
    Dh_pad = _round_up(Dh, _LANE)
    scale = 1.0 / math.sqrt(Dh)

    def pad_w(w, s=1.0):
        w = (w * s).reshape(D, H, Dh)
        w = jnp.pad(w, ((0, 0), (0, 0), (0, Dh_pad - Dh)))
        return w.reshape(D, H * Dh_pad)

    def pad_b(b, s=1.0):
        b = (b * s).reshape(H, Dh)
        b = jnp.pad(b, ((0, 0), (0, Dh_pad - Dh)))
        return b.reshape(H * Dh_pad)

    wqkv = jnp.concatenate(
        [pad_w(p["wq"], scale), pad_w(p["wk"]), pad_w(p["wv"])], axis=1)
    bqkv = jnp.concatenate(
        [pad_b(p["bq"], scale), pad_b(p["bk"]), pad_b(p["bv"])], axis=0)
    wo = jnp.pad(p["wo"].reshape(H, Dh, D),
                 ((0, 0), (0, Dh_pad - Dh), (0, 0))).reshape(H * Dh_pad, D)

    # TODO(synk): at production shapes also cast these weights (and the in-kernel
    # matmul operands) to bf16 with f32 MXU accumulation; kept f32 here so the
    # 1e-4 check against the f32 reference holds exactly.
    return {
        "h": H, "dh_pad": Dh_pad,
        "ln1_g": p["ln1_g"], "ln1_b": p["ln1_b"],
        "ln2_g": p["ln2_g"], "ln2_b": p["ln2_b"],
        "wqkv": wqkv, "bqkv": bqkv, "wo": wo, "bo": p["bo"],
        "w1": p["w1"], "b1": p["b1"], "w2": p["w2"], "b2": p["b2"],
    }


# --------------------------- encoder-layer forward --------------------------

def encoder_layer_forward(x, prep):
    B, S, D = x.shape
    # sublayer[0]: x + self_attn(norm(x), norm(x), norm(x), mask=None)
    x = attention_sublayer(x, prep["ln1_g"], prep["ln1_b"], prep["wqkv"],
                           prep["bqkv"], prep["wo"], prep["bo"],
                           prep["h"], prep["dh_pad"])
    # sublayer[1]: x + feed_forward(norm(x)) -- row-tiled over B*S, D_FF-tiled.
    # TODO(synk): at production S, additionally tile queries / stream K,V
    # flash-style inside the attention kernel (the (S,S) score block here is tiny).
    x2 = ffn_sublayer(x.reshape(B * S, D), prep["ln2_g"], prep["ln2_b"],
                      prep["w1"], prep["b1"], prep["w2"], prep["b2"])
    return x2.reshape(B, S, D)


# ------------------------------- reference ----------------------------------

def reference_forward(x, p):
    def ln(x, g, b):
        mean = x.mean(-1, keepdims=True)
        diff = x - mean
        std = jnp.sqrt((diff ** 2).sum(-1, keepdims=True) / (x.shape[-1] - 1))
        return g * diff / (std + 1e-6) + b

    B, S, D = x.shape
    H = p["h"]; Dh = D // H
    xn = ln(x, p["ln1_g"], p["ln1_b"])
    q = (xn @ p["wq"] + p["bq"]).reshape(B, S, H, Dh).transpose(0, 2, 1, 3)
    k = (xn @ p["wk"] + p["bk"]).reshape(B, S, H, Dh).transpose(0, 2, 1, 3)
    v = (xn @ p["wv"] + p["bv"]).reshape(B, S, H, Dh).transpose(0, 2, 1, 3)
    scores = jnp.einsum("bhqd,bhkd->bhqk", q, k) / math.sqrt(Dh)
    attn = jax.nn.softmax(scores, axis=-1)
    o = jnp.einsum("bhqk,bhkd->bhqd", attn, v).transpose(0, 2, 1, 3).reshape(B, S, D)
    x = x + (o @ p["wo"] + p["bo"])
    xn = ln(x, p["ln2_g"], p["ln2_b"])
    h = jnp.maximum(xn @ p["w1"] + p["b1"], 0.0)
    return x + (h @ p["w2"] + p["b2"])


# ---------------------------------- main -------------------------------------

if __name__ == "__main__":
    B, S, D, H, D_FF = 2, 8, 32, 4, 64

    key = jax.random.PRNGKey(0)
    ks = jax.random.split(key, 12)

    def w(k, shape):
        return 0.05 * jax.random.normal(k, shape, jnp.float32)

    params = {
        "h": H,
        "ln1_g": jnp.ones((D,), jnp.float32), "ln1_b": jnp.zeros((D,), jnp.float32),
        "ln2_g": jnp.ones((D,), jnp.float32), "ln2_b": jnp.zeros((D,), jnp.float32),
        "wq": w(ks[0], (D, D)), "bq": w(ks[1], (D,)),
        "wk": w(ks[2], (D, D)), "bk": w(ks[3], (D,)),
        "wv": w(ks[4], (D, D)), "bv": w(ks[5], (D,)),
        "wo": w(ks[6], (D, D)), "bo": w(ks[7], (D,)),
        "w1": w(ks[8], (D, D_FF)), "b1": jnp.zeros((D_FF,), jnp.float32),
        "w2": w(ks[9], (D_FF, D)), "b2": jnp.zeros((D,), jnp.float32),
    }

    x = jax.random.normal(ks[10], (B, S, D), jnp.float32)

    prep = jax.tree_util.tree_map(jax.block_until_ready,
                                  prepare_encoder_params(params))
    out = jax.block_until_ready(encoder_layer_forward(x, prep))
    ref = jax.block_until_ready(reference_forward(x, params))

    assert out.shape == (B, S, D)
    assert jnp.allclose(out, ref, atol=1e-4, rtol=1e-4), float(jnp.abs(out - ref).max())

    print("KERNEL_OK")
</pallas_src>

<mosaic_0001>
module attributes {stable_mosaic.version = 11 : i64} {
  func.func @_attn_sublayer_kernel(%arg0: i32, %arg1: memref<1x8x32xf32, #tpu.memory_space<vmem>>, %arg2: memref<1x32xf32, #tpu.memory_space<vmem>>, %arg3: memref<1x32xf32, #tpu.memory_space<vmem>>, %arg4: memref<32x1536xf32, #tpu.memory_space<vmem>>, %arg5: memref<1x1536xf32, #tpu.memory_space<vmem>>, %arg6: memref<512x32xf32, #tpu.memory_space<vmem>>, %arg7: memref<1x32xf32, #tpu.memory_space<vmem>>, %arg8: memref<1x8x32xf32, #tpu.memory_space<vmem>>, %arg9: memref<8x512xf32, #tpu.memory_space<vmem>>) attributes {dimension_semantics = [#tpu.dimension_semantics<parallel>], iteration_bounds = array<i64: 2>, scalar_prefetch = 0 : i64, scratch_operands = 1 : i64, tpu.core_type = #tpu.core_type<tc>, window_params = [{transform_indices = @transform_0, window_bounds = array<i64: 1, 8, 32>}, {pipeline_mode = #tpu.pipeline_mode<synchronous>, transform_indices = @transform_1, window_bounds = array<i64: 1, 32>}, {pipeline_mode = #tpu.pipeline_mode<synchronous>, transform_indices = @transform_2, window_bounds = array<i64: 1, 32>}, {pipeline_mode = #tpu.pipeline_mode<synchronous>, transform_indices = @transform_3, window_bounds = array<i64: 32, 1536>}, {pipeline_mode = #tpu.pipeline_mode<synchronous>, transform_indices = @transform_4, window_bounds = array<i64: 1, 1536>}, {pipeline_mode = #tpu.pipeline_mode<synchronous>, transform_indices = @transform_5, window_bounds = array<i64: 512, 32>}, {pipeline_mode = #tpu.pipeline_mode<synchronous>, transform_indices = @transform_6, window_bounds = array<i64: 1, 32>}, {transform_indices = @transform_7, window_bounds = array<i64: 1, 8, 32>}]} {
    %c0 = arith.constant 0 : index
    %c0_0 = arith.constant 0 : index
    %c0_1 = arith.constant 0 : index
    %0 = vector.load %arg1[%c0, %c0_0, %c0_1] : memref<1x8x32xf32, #tpu.memory_space<vmem>>, vector<1x8x32xf32>
    %1 = vector.shape_cast %0 : vector<1x8x32xf32> to vector<8x32xf32>
    %c0_2 = arith.constant 0 : index
    %c0_3 = arith.constant 0 : index
    %2 = vector.load %arg2[%c0_2, %c0_3] : memref<1x32xf32, #tpu.memory_space<vmem>>, vector<1x32xf32>
    %c0_4 = arith.constant 0 : index
    %c0_5 = arith.constant 0 : index
    %3 = vector.load %arg3[%c0_4, %c0_5] : memref<1x32xf32, #tpu.memory_space<vmem>>, vector<1x32xf32>
    %cst = arith.constant dense<0.000000e+00> : vector<8xf32>
    %4 = vector.multi_reduction <add>, %1, %cst [1] : vector<8x32xf32> to vector<8xf32>
    %5 = vector.shape_cast %4 : vector<8xf32> to vector<8x1xf32>
    %cst_6 = arith.constant 3.200000e+01 : f32
    %6 = vector.broadcast %cst_6 : f32 to vector<8x1xf32>
    %7 = arith.divf %5, %6 : vector<8x1xf32>
    %8 = vector.broadcast %7 : vector<8x1xf32> to vector<8x32xf32>
    %9 = arith.subf %1, %8 : vector<8x32xf32>
    %10 = arith.mulf %9, %9 : vector<8x32xf32>
    %cst_7 = arith.constant dense<0.000000e+00> : vector<8xf32>
    %11 = vector.multi_reduction <add>, %10, %cst_7 [1] : vector<8x32xf32> to vector<8xf32>
    %12 = vector.shape_cast %11 : vector<8xf32> to vector<8x1xf32>
    %cst_8 = arith.constant 3.100000e+01 : f32
    %13 = vector.broadcast %cst_8 : f32 to vector<8x1xf32>
    %14 = arith.divf %12, %13 : vector<8x1xf32>
    %15 = vector.broadcast %2 : vector<1x32xf32> to vector<8x32xf32>
    %16 = arith.mulf %15, %9 : vector<8x32xf32>
    %17 = math.sqrt %14 : vector<8x1xf32>
    %cst_9 = arith.constant 9.99999997E-7 : f32
    %18 = vector.broadcast %cst_9 : f32 to vector<8x1xf32>
    %19 = arith.addf %17, %18 : vector<8x1xf32>
    %20 = vector.broadcast %19 : vector<8x1xf32> to vector<8x32xf32>
    %21 = arith.divf %16, %20 : vector<8x32xf32>
    %22 = vector.broadcast %3 : vector<1x32xf32> to vector<8x32xf32>
    %23 = arith.addf %21, %22 : vector<8x32xf32>
    %c0_10 = arith.constant 0 : index
    %c0_11 = arith.constant 0 : index
    %24 = vector.load %arg4[%c0_10, %c0_11] : memref<32x1536xf32, #tpu.memory_space<vmem>>, vector<32x1536xf32>
    %cst_12 = arith.constant dense<0.000000e+00> : vector<8x1536xf32>
    %25 = tpu.matmul %23, %24, %cst_12 {dimension_numbers = #tpu.dot_dimension_numbers<[1], [0], [0], [1], [0, 0, 1, 1], [], []>} : vector<8x32xf32>, vector<32x1536xf32>, vector<8x1536xf32> -> vector<8x1536xf32>
    %c0_13 = arith.constant 0 : index
    %c0_14 = arith.constant 0 : index
    %26 = vector.load %arg5[%c0_13, %c0_14] : memref<1x1536xf32, #tpu.memory_space<vmem>>, vector<1x1536xf32>
    %27 = vector.broadcast %26 : vector<1x1536xf32> to vector<8x1536xf32>
    %28 = arith.addf %25, %27 : vector<8x1536xf32>
    %29 = vector.extract_strided_slice %28 {offsets = [0, 0], sizes = [8, 128], strides = [1, 1]} : vector<8x1536xf32> to vector<8x128xf32>
    %30 = vector.extract_strided_slice %28 {offsets = [0, 512], sizes = [8, 128], strides = [1, 1]} : vector<8x1536xf32> to vector<8x128xf32>
    %31 = vector.extract_strided_slice %28 {offsets = [0, 1024], sizes = [8, 128], strides = [1, 1]} : vector<8x1536xf32> to vector<8x128xf32>
    %cst_15 = arith.constant dense<0.000000e+00> : vector<8x8xf32>
    %32 = tpu.matmul %29, %30, %cst_15 {dimension_numbers = #tpu.dot_dimension_numbers<[1], [1], [0], [0], [0, 0, 1, 0], [], []>} : vector<8x128xf32>, vector<8x128xf32>, vector<8x8xf32> -> vector<8x8xf32>
    %cst_16 = arith.constant dense<0xFF800000> : vector<8xf32>
    %33 = vector.multi_reduction <maximumf>, %32, %cst_16 [1] : vector<8x8xf32> to vector<8xf32>
    %34 = vector.shape_cast %33 : vector<8xf32> to vector<8x1xf32>
    %35 = vector.broadcast %34 : vector<8x1xf32> to vector<8x8xf32>
    %36 = arith.subf %32, %35 : vector<8x8xf32>
    %37 = math.exp %36 : vector<8x8xf32>
    %cst_17 = arith.constant dense<0.000000e+00> : vector<8xf32>
    %38 = vector.multi_reduction <add>, %37, %cst_17 [1] : vector<8x8xf32> to vector<8xf32>
    %39 = vector.shape_cast %38 : vector<8xf32> to vector<8x1xf32>
    %40 = tpu.reciprocal %39 : vector<8x1xf32> -> vector<8x1xf32>
    %41 = vector.broadcast %40 : vector<8x1xf32> to vector<8x8xf32>
    %42 = arith.mulf %37, %41 : vector<8x8xf32>
    %cst_18 = arith.constant dense<0.000000e+00> : vector<8x128xf32>
    %43 = tpu.matmul %42, %31, %cst_18 {dimension_numbers = #tpu.dot_dimension_numbers<[1], [0], [0], [1], [0, 0, 1, 1], [], []>} : vector<8x8xf32>, vector<8x128xf32>, vector<8x128xf32> -> vector<8x128xf32>
    %c0_19 = arith.constant 0 : index
    %c0_20 = arith.constant 0 : index
    %44 = vector.load %arg9[%c0_19, %c0_20] : memref<8x512xf32, #tpu.memory_space<vmem>>, vector<8x128xf32>
    tpu.vector_store %arg9[%c0_19, %c0_20], %43 {strides = array<i32>} : memref<8x512xf32, #tpu.memory_space<vmem>>, vector<8x128xf32>,
    %45 = vector.extract_strided_slice %28 {offsets = [0, 128], sizes = [8, 128], strides = [1, 1]} : vector<8x1536xf32> to vector<8x128xf32>
    %46 = vector.extract_strided_slice %28 {offsets = [0, 640], sizes = [8, 128], strides = [1, 1]} : vector<8x1536xf32> to vector<8x128xf32>
    %47 = vector.extract_strided_slice %28 {offsets = [0, 1152], sizes = [8, 128], strides = [1, 1]} : vector<8x1536xf32> to vector<8x128xf32>
    %cst_21 = arith.constant dense<0.000000e+00> : vector<8x8xf32>
    %48 = tpu.matmul %45, %46, %cst_21 {dimension_numbers = #tpu.dot_dimension_numbers<[1], [1], [0], [0], [0, 0, 1, 0], [], []>} : vector<8x128xf32>, vector<8x128xf32>, vector<8x8xf32> -> vector<8x8xf32>
    %cst_22 = arith.constant dense<0xFF800000> : vector<8xf32>
    %49 = vector.multi_reduction <maximumf>, %48, %cst_22 [1] : vector<8x8xf32> to vector<8xf32>
    %50 = vector.shape_cast %49 : vector<8xf32> to vector<8x1xf32>
    %51 = vector.broadcast %50 : vector<8x1xf32> to vector<8x8xf32>
    %52 = arith.subf %48, %51 : vector<8x8xf32>
    %53 = math.exp %52 : vector<8x8xf32>
    %cst_23 = arith.constant dense<0.000000e+00> : vector<8xf32>
    %54 = vector.multi_reduction <add>, %53, %cst_23 [1] : vector<8x8xf32> to vector<8xf32>
    %55 = vector.shape_cast %54 : vector<8xf32> to vector<8x1xf32>
    %56 = tpu.reciprocal %55 : vector<8x1xf32> -> vector<8x1xf32>
    %57 = vector.broadcast %56 : vector<8x1xf32> to vector<8x8xf32>
    %58 = arith.mulf %53, %57 : vector<8x8xf32>
    %cst_24 = arith.constant dense<0.000000e+00> : vector<8x128xf32>
    %59 = tpu.matmul %58, %47, %cst_24 {dimension_numbers = #tpu.dot_dimension_numbers<[1], [0], [0], [1], [0, 0, 1, 1], [], []>} : vector<8x8xf32>, vector<8x128xf32>, vector<8x128xf32> -> vector<8x128xf32>
    %c0_25 = arith.constant 0 : index
    %c128 = arith.constant 128 : index
    %60 = vector.load %arg9[%c0_25, %c128] : memref<8x512xf32, #tpu.memory_space<vmem>>, vector<8x128xf32>
    tpu.vector_store %arg9[%c0_25, %c128], %59 {strides = array<i32>} : memref<8x512xf32, #tpu.memory_space<vmem>>, vector<8x128xf32>,
    %61 = vector.extract_strided_slice %28 {offsets = [0, 256], sizes = [8, 128], strides = [1, 1]} : vector<8x1536xf32> to vector<8x128xf32>
    %62 = vector.extract_strided_slice %28 {offsets = [0, 768], sizes = [8, 128], strides = [1, 1]} : vector<8x1536xf32> to vector<8x128xf32>
    %63 = vector.extract_strided_slice %28 {offsets = [0, 1280], sizes = [8, 128], strides = [1, 1]} : vector<8x1536xf32> to vector<8x128xf32>
    %cst_26 = arith.constant dense<0.000000e+00> : vector<8x8xf32>
    %64 = tpu.matmul %61, %62, %cst_26 {dimension_numbers = #tpu.dot_dimension_numbers<[1], [1], [0], [0], [0, 0, 1, 0], [], []>} : vector<8x128xf32>, vector<8x128xf32>, vector<8x8xf32> -> vector<8x8xf32>
    %cst_27 = arith.constant dense<0xFF800000> : vector<8xf32>
    %65 = vector.multi_reduction <maximumf>, %64, %cst_27 [1] : vector<8x8xf32> to vector<8xf32>
    %66 = vector.shape_cast %65 : vector<8xf32> to vector<8x1xf32>
    %67 = vector.broadcast %66 : vector<8x1xf32> to vector<8x8xf32>
    %68 = arith.subf %64, %67 : vector<8x8xf32>
    %69 = math.exp %68 : vector<8x8xf32>
    %cst_28 = arith.constant dense<0.000000e+00> : vector<8xf32>
    %70 = vector.multi_reduction <add>, %69, %cst_28 [1] : vector<8x8xf32> to vector<8xf32>
    %71 = vector.shape_cast %70 : vector<8xf32> to vector<8x1xf32>
    %72 = tpu.reciprocal %71 : vector<8x1xf32> -> vector<8x1xf32>
    %73 = vector.broadcast %72 : vector<8x1xf32> to vector<8x8xf32>
    %74 = arith.mulf %69, %73 : vector<8x8xf32>
    %cst_29 = arith.constant dense<0.000000e+00> : vector<8x128xf32>
    %75 = tpu.matmul %74, %63, %cst_29 {dimension_numbers = #tpu.dot_dimension_numbers<[1], [0], [0], [1], [0, 0, 1, 1], [], []>} : vector<8x8xf32>, vector<8x128xf32>, vector<8x128xf32> -> vector<8x128xf32>
    %c0_30 = arith.constant 0 : index
    %c256 = arith.constant 256 : index
    %76 = vector.load %arg9[%c0_30, %c256] : memref<8x512xf32, #tpu.memory_space<vmem>>, vector<8x128xf32>
    tpu.vector_store %arg9[%c0_30, %c256], %75 {strides = array<i32>} : memref<8x512xf32, #tpu.memory_space<vmem>>, vector<8x128xf32>,
    %77 = vector.extract_strided_slice %28 {offsets = [0, 384], sizes = [8, 128], strides = [1, 1]} : vector<8x1536xf32> to vector<8x128xf32>
    %78 = vector.extract_strided_slice %28 {offsets = [0, 896], sizes = [8, 128], strides = [1, 1]} : vector<8x1536xf32> to vector<8x128xf32>
    %79 = vector.extract_strided_slice %28 {offsets = [0, 1408], sizes = [8, 128], strides = [1, 1]} : vector<8x1536xf32> to vector<8x128xf32>
    %cst_31 = arith.constant dense<0.000000e+00> : vector<8x8xf32>
    %80 = tpu.matmul %77, %78, %cst_31 {dimension_numbers = #tpu.dot_dimension_numbers<[1], [1], [0], [0], [0, 0, 1, 0], [], []>} : vector<8x128xf32>, vector<8x128xf32>, vector<8x8xf32> -> vector<8x8xf32>
    %cst_32 = arith.constant dense<0xFF800000> : vector<8xf32>
    %81 = vector.multi_reduction <maximumf>, %80, %cst_32 [1] : vector<8x8xf32> to vector<8xf32>
    %82 = vector.shape_cast %81 : vector<8xf32> to vector<8x1xf32>
    %83 = vector.broadcast %82 : vector<8x1xf32> to vector<8x8xf32>
    %84 = arith.subf %80, %83 : vector<8x8xf32>
    %85 = math.exp %84 : vector<8x8xf32>
    %cst_33 = arith.constant dense<0.000000e+00> : vector<8xf32>
    %86 = vector.multi_reduction <add>, %85, %cst_33 [1] : vector<8x8xf32> to vector<8xf32>
    %87 = vector.shape_cast %86 : vector<8xf32> to vector<8x1xf32>
    %88 = tpu.reciprocal %87 : vector<8x1xf32> -> vector<8x1xf32>
    %89 = vector.broadcast %88 : vector<8x1xf32> to vector<8x8xf32>
    %90 = arith.mulf %85, %89 : vector<8x8xf32>
    %cst_34 = arith.constant dense<0.000000e+00> : vector<8x128xf32>
    %91 = tpu.matmul %90, %79, %cst_34 {dimension_numbers = #tpu.dot_dimension_numbers<[1], [0], [0], [1], [0, 0, 1, 1], [], []>} : vector<8x8xf32>, vector<8x128xf32>, vector<8x128xf32> -> vector<8x128xf32>
    %c0_35 = arith.constant 0 : index
    %c384 = arith.constant 384 : index
    %92 = vector.load %arg9[%c0_35, %c384] : memref<8x512xf32, #tpu.memory_space<vmem>>, vector<8x128xf32>
    tpu.vector_store %arg9[%c0_35, %c384], %91 {strides = array<i32>} : memref<8x512xf32, #tpu.memory_space<vmem>>, vector<8x128xf32>,
    %c0_36 = arith.constant 0 : index
    %c0_37 = arith.constant 0 : index
    %93 = vector.load %arg7[%c0_36, %c0_37] : memref<1x32xf32, #tpu.memory_space<vmem>>, vector<1x32xf32>
    %94 = vector.broadcast %93 : vector<1x32xf32> to vector<8x32xf32>
    %95 = arith.addf %1, %94 : vector<8x32xf32>
    %c0_38 = arith.constant 0 : index
    %c0_39 = arith.constant 0 : index
    %96 = vector.load %arg9[%c0_38, %c0_39] : memref<8x512xf32, #tpu.memory_space<vmem>>, vector<8x512xf32>
    %c0_40 = arith.constant 0 : index
    %c0_41 = arith.constant 0 : index
    %97 = vector.load %arg6[%c0_40, %c0_41] : memref<512x32xf32, #tpu.memory_space<vmem>>, vector<512x32xf32>
    %cst_42 = arith.constant dense<0.000000e+00> : vector<8x32xf32>
    %98 = tpu.matmul %96, %97, %cst_42 {dimension_numbers = #tpu.dot_dimension_numbers<[1], [0], [0], [1], [0, 0, 1, 1], [], []>} : vector<8x512xf32>, vector<512x32xf32>, vector<8x32xf32> -> vector<8x32xf32>
    %99 = arith.addf %95, %98 : vector<8x32xf32>
    %c0_43 = arith.constant 0 : index
    %c0_44 = arith.constant 0 : index
    %c0_45 = arith.constant 0 : index
    %100 = vector.load %arg8[%c0_43, %c0_44, %c0_45] : memref<1x8x32xf32, #tpu.memory_space<vmem>>, vector<1x8x32xf32>
    %101 = vector.shape_cast %100 : vector<1x8x32xf32> to vector<8x32xf32>
    %102 = vector.shape_cast %99 : vector<8x32xf32> to vector<1x8x32xf32>
    tpu.vector_store %arg8[%c0_43, %c0_44, %c0_45], %102 {strides = array<i32>} : memref<1x8x32xf32, #tpu.memory_space<vmem>>, vector<1x8x32xf32>,
    return
  }
  func.func @transform_0(%arg0: i32) -> (i32, i32, i32) {
    %c0_i32 = arith.constant 0 : i32
    %c0_i32_0 = arith.constant 0 : i32
    %c0_i32_1 = arith.constant 0 : i32
    return %arg0, %c0_i32, %c0_i32_0 : i32, i32, i32
  }
  func.func @transform_1(%arg0: i32) -> (i32, i32) {
    %c0_i32 = arith.constant 0 : i32
    %c0_i32_0 = arith.constant 0 : i32
    %c0_i32_1 = arith.constant 0 : i32
    return %c0_i32, %c0_i32_0 : i32, i32
  }
  func.func @transform_2(%arg0: i32) -> (i32, i32) {
    %c0_i32 = arith.constant 0 : i32
    %c0_i32_0 = arith.constant 0 : i32
    %c0_i32_1 = arith.constant 0 : i32
    return %c0_i32, %c0_i32_0 : i32, i32
  }
  func.func @transform_3(%arg0: i32) -> (i32, i32) {
    %c0_i32 = arith.constant 0 : i32
    %c0_i32_0 = arith.constant 0 : i32
    %c0_i32_1 = arith.constant 0 : i32
    return %c0_i32, %c0_i32_0 : i32, i32
  }
  func.func @transform_4(%arg0: i32) -> (i32, i32) {
    %c0_i32 = arith.constant 0 : i32
    %c0_i32_0 = arith.constant 0 : i32
    %c0_i32_1 = arith.constant 0 : i32
    return %c0_i32, %c0_i32_0 : i32, i32
  }
  func.func @transform_5(%arg0: i32) -> (i32, i32) {
    %c0_i32 = arith.constant 0 : i32
    %c0_i32_0 = arith.constant 0 : i32
    %c0_i32_1 = arith.constant 0 : i32
    return %c0_i32, %c0_i32_0 : i32, i32
  }
  func.func @transform_6(%arg0: i32) -> (i32, i32) {
    %c0_i32 = arith.constant 0 : i32
    %c0_i32_0 = arith.constant 0 : i32
    %c0_i32_1 = arith.constant 0 : i32
    return %c0_i32, %c0_i32_0 : i32, i32
  }
  func.func @transform_7(%arg0: i32) -> (i32, i32, i32) {
    %c0_i32 = arith.constant 0 : i32
    %c0_i32_0 = arith.constant 0 : i32
    %c0_i32_1 = arith.constant 0 : i32
    return %arg0, %c0_i32, %c0_i32_0 : i32, i32, i32
  }
}

</mosaic_0001>

<llo_original>
// kernel: tpu_custom_call.1
$region0: #{tpu_custom_call.1}
  #allocation0 [shape = 'u32[]', space=smem, size = 0x4, offset = 0x4, fixed_abs, tag = 'smem constant byte address 0x4 - core index']
  #allocation1 [shape = 'u32[144,128]{1,0:T(1,128)}', space=vmem, size = 0x12000, scoped, tag = 'internal scratch']
  #allocation2 [shape = 'f32[8,512]{1,0:T(8,128)}', space=vmem, size = 0x4000, scoped, tag = 'scratch operand']
  %s0 = inlined_call_operand.vmem [shape: f32[2,8,32], index: 0, kind: input, shape index: {}]
  %s1 = inlined_call_operand.vmem [shape: f32[1,32], index: 1, kind: input, shape index: {}]
  %s2 = inlined_call_operand.vmem [shape: f32[1,32], index: 2, kind: input, shape index: {}]
  %s3 = inlined_call_operand.vmem [shape: f32[32,1536], index: 3, kind: input, shape index: {}]
  %s4 = inlined_call_operand.vmem [shape: f32[1,1536], index: 4, kind: input, shape index: {}]
  %s5 = inlined_call_operand.vmem [shape: f32[512,32], index: 5, kind: input, shape index: {}]
  %s6 = inlined_call_operand.vmem [shape: f32[1,32], index: 6, kind: input, shape index: {}]
  %s7 = inlined_call_operand.hbm [shape: f32[2,8,32], index: 7, kind: output, shape index: {}]
  %s8 = sld [smem:[#allocation0]]
  $region61: #{tpu_custom_call.1} parent=0
    _
  %s10 = ssub.s32 1, %s8
  %s11 = scalar_select 0, %s10, %s8
  $region1: #{tpu_custom_call.1} parent=0
    #allocation3 [shape = 'u8[8192]{0}', space=vmem, size = 0x2000, scoped, tag = 'output window, operand 0']
    #allocation4 [shape = 's32[2]{0}', space=sflag, size = 0x8, scoped, tag = 'scoped memory for tpu_custom_call.1']
    %12 = vsyncpa [#allocation4], 0
    %s13 = scalar_lea.sflag [#allocation4], 1
    %14 = vsyncpa %s13, 0
    loop: start=0, step=1, limit=4
    $region2: #{tpu_custom_call.1} parent=1 // loop_pre_header
      _
    $region3: #{tpu_custom_call.1} parent=1 // loop_header
      %s16 = sphi 0, %s20
      %p17 = scmp.ge.s32.totalorder %s16, 4
      %s26 = sphi 0, %s28
      %s29 = sphi 0, %s26
      %s30 = sphi 0, %s29
      %s46 = sphi 0, %s30
      %s50 = sphi 0, %s50
      %s52 = sphi 0, %s50
      %s53 = sphi 0, %s52
      %s67 = sphi 0, %s53
      %s71 = sphi 0, %s71
      %s73 = sphi 0, %s71
      %s74 = sphi 0, %s73
      %s88 = sphi 0, %s74
      %s92 = sphi 0, %s92
      %s94 = sphi 0, %s92
      %s95 = sphi 0, %s94
      %s109 = sphi 0, %s95
      %s113 = sphi 0, %s113
      %s115 = sphi 0, %s113
      %s116 = sphi 0, %s115
      %s130 = sphi 0, %s116
      %s134 = sphi 0, %s134
      %s136 = sphi 0, %s134
      %s137 = sphi 0, %s136
      %s151 = sphi 0, %s137
      %s155 = sphi 0, %s155
      %s157 = sphi 0, %s155
      %s158 = sphi 0, %s157
      %s172 = sphi 0, %s158
      %s178 = sphi 0, %s180
      %s181 = sphi 0, %s178
      %s182 = sphi 0, %s181
      %s198 = sphi 0, %s182
    $region4: #{tpu_custom_call.1} parent=1 // loop_header_branch
      %19 = sbr.rel (%p17) target = $region8
    $region5: #{tpu_custom_call.1} parent=1 // loop_body
      %s21 = ssub.s32 %s16, 1
      %s22 = ssub.s32 %s16, 2
      %s23 = sadd.s32 %s16, 1
      %s24 = ssub.s32 %s16, %s23
      %p25 = scmp.eq.s32.totalorder %s24, 0
      %s27 = sadd.s32 %s26, 1
      %s28 = scalar_select %p25, %s26, %s27
      %p31 = pneg %p25
      %p32 = scmp.eq.s32.totalorder %s16, 1
      %p33 = por %p31, %p32
      %p34 = scmp.ne.s32.totalorder %s26, %s29
      %p35 = scmp.eq.s32.totalorder %s16, 0
      %p36 = por %p34, %p35
      %p37 = scmp.ne.s32.totalorder %s26, %s29
      %p38 = scmp.eq.s32.totalorder %s21, 1
      %p39 = por %p37, %p38
      %p40 = scmp.ne.s32.totalorder %s29, %s30
      %p41 = scmp.eq.s32.totalorder %s21, 0
      %p42 = por %p40, %p41
      %p43 = scmp.ne.s32.totalorder %s29, %s30
      %p44 = scmp.eq.s32.totalorder %s22, 1
      %p45 = por %p43, %p44
      %p47 = scmp.ne.s32.totalorder %s30, %s46
      %p48 = scmp.eq.s32.totalorder %s22, 0
      %p49 = por %p47, %p48
      %s51 = sadd.s32 %s50, 1
      %p54 = scmp.eq.s32.totalorder %s16, 1
      %p55 = scmp.ne.s32.totalorder %s50, %s52
      %p56 = scmp.eq.s32.totalorder %s16, 0
      %p57 = por %p55, %p56
      %p58 = scmp.ne.s32.totalorder %s50, %s52
      %p59 = scmp.eq.s32.totalorder %s21, 1
      %p60 = por %p58, %p59
      %p61 = scmp.ne.s32.totalorder %s52, %s53
      %p62 = scmp.eq.s32.totalorder %s21, 0
      %p63 = por %p61, %p62
      %p64 = scmp.ne.s32.totalorder %s52, %s53
      %p65 = scmp.eq.s32.totalorder %s22, 1
      %p66 = por %p64, %p65
      %p68 = scmp.ne.s32.totalorder %s53, %s67
      %p69 = scmp.eq.s32.totalorder %s22, 0
      %p70 = por %p68, %p69
      %s72 = sadd.s32 %s71, 1
      %p75 = scmp.eq.s32.totalorder %s16, 1
      %p76 = scmp.ne.s32.totalorder %s71, %s73
      %p77 = scmp.eq.s32.totalorder %s16, 0
      %p78 = por %p76, %p77
      %p79 = scmp.ne.s32.totalorder %s71, %s73
      %p80 = scmp.eq.s32.totalorder %s21, 1
      %p81 = por %p79, %p80
      %p82 = scmp.ne.s32.totalorder %s73, %s74
      %p83 = scmp.eq.s32.totalorder %s21, 0
      %p84 = por %p82, %p83
      %p85 = scmp.ne.s32.totalorder %s73, %s74
      %p86 = scmp.eq.s32.totalorder %s22, 1
      %p87 = por %p85, %p86
      %p89 = scmp.ne.s32.totalorder %s74, %s88
      %p90 = scmp.eq.s32.totalorder %s22, 0
      %p91 = por %p89, %p90
      %s93 = sadd.s32 %s92, 1
      %p96 = scmp.eq.s32.totalorder %s16, 1
      %p97 = scmp.ne.s32.totalorder %s92, %s94
      %p98 = scmp.eq.s32.totalorder %s16, 0
      %p99 = por %p97, %p98
      %p100 = scmp.ne.s32.totalorder %s92, %s94
      %p101 = scmp.eq.s32.totalorder %s21, 1
      %p102 = por %p100, %p101
      %p103 = scmp.ne.s32.totalorder %s94, %s95
      %p104 = scmp.eq.s32.totalorder %s21, 0
      %p105 = por %p103, %p104
      %p106 = scmp.ne.s32.totalorder %s94, %s95
      %p107 = scmp.eq.s32.totalorder %s22, 1
      %p108 = por %p106, %p107
      %p110 = scmp.ne.s32.totalorder %s95, %s109
      %p111 = scmp.eq.s32.totalorder %s22, 0
      %p112 = por %p110, %p111
      %s114 = sadd.s32 %s113, 1
      %p117 = scmp.eq.s32.totalorder %s16, 1
      %p118 = scmp.ne.s32.totalorder %s113, %s115
      %p119 = scmp.eq.s32.totalorder %s16, 0
      %p120 = por %p118, %p119
      %p121 = scmp.ne.s32.totalorder %s113, %s115
      %p122 = scmp.eq.s32.totalorder %s21, 1
      %p123 = por %p121, %p122
      %p124 = scmp.ne.s32.totalorder %s115, %s116
      %p125 = scmp.eq.s32.totalorder %s21, 0
      %p126 = por %p124, %p125
      %p127 = scmp.ne.s32.totalorder %s115, %s116
      %p128 = scmp.eq.s32.totalorder %s22, 1
      %p129 = por %p127, %p128
      %p131 = scmp.ne.s32.totalorder %s116, %s130
      %p132 = scmp.eq.s32.totalorder %s22, 0
      %p133 = por %p131, %p132
      %s135 = sadd.s32 %s134, 1
      %p138 = scmp.eq.s32.totalorder %s16, 1
      %p139 = scmp.ne.s32.totalorder %s134, %s136
      %p140 = scmp.eq.s32.totalorder %s16, 0
      %p141 = por %p139, %p140
      %p142 = scmp.ne.s32.totalorder %s134, %s136
      %p143 = scmp.eq.s32.totalorder %s21, 1
      %p144 = por %p142, %p143
      %p145 = scmp.ne.s32.totalorder %s136, %s137
      %p146 = scmp.eq.s32.totalorder %s21, 0
      %p147 = por %p145, %p146
      %p148 = scmp.ne.s32.totalorder %s136, %s137
      %p149 = scmp.eq.s32.totalorder %s22, 1
      %p150 = por %p148, %p149
      %p152 = scmp.ne.s32.totalorder %s137, %s151
      %p153 = scmp.eq.s32.totalorder %s22, 0
      %p154 = por %p152, %p153
      %s156 = sadd.s32 %s155, 1
      %p159 = scmp.eq.s32.totalorder %s16, 1
      %p160 = scmp.ne.s32.totalorder %s155, %s157
      %p161 = scmp.eq.s32.totalorder %s16, 0
      %p162 = por %p160, %p161
      %p163 = scmp.ne.s32.totalorder %s155, %s157
      %p164 = scmp.eq.s32.totalorder %s21, 1
      %p165 = por %p163, %p164
      %p166 = scmp.ne.s32.totalorder %s157, %s158
      %p167 = scmp.eq.s32.totalorder %s21, 0
      %p168 = por %p166, %p167
      %p169 = scmp.ne.s32.totalorder %s157, %s158
      %p170 = scmp.eq.s32.totalorder %s22, 1
      %p171 = por %p169, %p170
      %p173 = scmp.ne.s32.totalorder %s158, %s172
      %p174 = scmp.eq.s32.totalorder %s22, 0
      %p175 = por %p173, %p174
      %s176 = ssub.s32 %s16, %s23
      %p177 = scmp.eq.s32.totalorder %s176, 0
      %s179 = sadd.s32 %s178, 1
      %s180 = scalar_select %p177, %s178, %s179
      %p183 = pneg %p177
      %p184 = scmp.eq.s32.totalorder %s16, 1
      %p185 = por %p183, %p184
      %p186 = scmp.ne.s32.totalorder %s178, %s181
      %p187 = scmp.eq.s32.totalorder %s16, 0
      %p188 = por %p186, %p187
      %p189 = scmp.ne.s32.totalorder %s178, %s181
      %p190 = scmp.eq.s32.totalorder %s21, 1
      %p191 = por %p189, %p190
      %p192 = scmp.ne.s32.totalorder %s181, %s182
      %p193 = scmp.eq.s32.totalorder %s21, 0
      %p194 = por %p192, %p193
      %p195 = scmp.ne.s32.totalorder %s181, %s182
      %p196 = scmp.eq.s32.totalorder %s22, 1
      %p197 = por %p195, %p196
      %p199 = scmp.ne.s32.totalorder %s182, %s198
      %p200 = scmp.eq.s32.totalorder %s22, 0
      %p201 = por %p199, %p200
      %p202 = scmp.le.s32.totalorder 1, %s16
      %p203 = scmp.lt.s32.totalorder %s16, 3
      %p204 = pnand %p202, %p203
      %p205 = pneg %p204
      // Predicated region
      $region9: #{tpu_custom_call.1} parent=5 // pred_check
        _
      $region10: #{tpu_custom_call.1} parent=5 // pred_check_branch
        %207 = sbr.rel (%p204) target = $region12
      $region11: #{tpu_custom_call.1} parent=5 // pred_region
        %s208 = ssub.s32 %s16, 1
        // Predicated region
        $region13: #{tpu_custom_call.1} parent=11 // pred_check
          %p209 = pneg %p63
        $region14: #{tpu_custom_call.1} parent=11 // pred_check_branch
          %211 = sbr.rel (%p209) target = $region16
        $region15: #{tpu_custom_call.1} parent=11 // pred_region
          _
        $region16: #{tpu_custom_call.1} parent=11 // pred_fallthru
          _
        // Predicated region
        $region17: #{tpu_custom_call.1} parent=11 // pred_check
          %p212 = pneg %p84
        $region18: #{tpu_custom_call.1} parent=11 // pred_check_branch
          %214 = sbr.rel (%p212) target = $region20
        $region19: #{tpu_custom_call.1} parent=11 // pred_region
          _
        $region20: #{tpu_custom_call.1} parent=11 // pred_fallthru
          _
        // Predicated region
        $region21: #{tpu_custom_call.1} parent=11 // pred_check
          %p215 = pneg %p105
        $region22: #{tpu_custom_call.1} parent=11 // pred_check_branch
          %217 = sbr.rel (%p215) target = $region24
        $region23: #{tpu_custom_call.1} parent=11 // pred_region
          _
        $region24: #{tpu_custom_call.1} parent=11 // pred_fallthru
          _
        // Predicated region
        $region25: #{tpu_custom_call.1} parent=11 // pred_check
          %p218 = pneg %p126
        $region26: #{tpu_custom_call.1} parent=11 // pred_check_branch
          %220 = sbr.rel (%p218) target = $region28
        $region27: #{tpu_custom_call.1} parent=11 // pred_region
          _
        $region28: #{tpu_custom_call.1} parent=11 // pred_fallthru
          _
        // Predicated region
        $region29: #{tpu_custom_call.1} parent=11 // pred_check
          %p221 = pneg %p147
        $region30: #{tpu_custom_call.1} parent=11 // pred_check_branch
          %223 = sbr.rel (%p221) target = $region32
        $region31: #{tpu_custom_call.1} parent=11 // pred_region
          _
        $region32: #{tpu_custom_call.1} parent=11 // pred_fallthru
          _
        // Predicated region
        $region33: #{tpu_custom_call.1} parent=11 // pred_check
          %p224 = pneg %p168
        $region34: #{tpu_custom_call.1} parent=11 // pred_check_branch
          %226 = sbr.rel (%p224) target = $region36
        $region35: #{tpu_custom_call.1} parent=11 // pred_region
          _
        $region36: #{tpu_custom_call.1} parent=11 // pred_fallthru
          _
      $region12: #{tpu_custom_call.1} parent=5 // pred_fallthru
        _
      %p227 = scmp.lt.s32.totalorder %s16, 2
      // Predicated region
      $region37: #{tpu_custom_call.1} parent=5 // pred_check
        %p228 = pneg %p227
      $region38: #{tpu_custom_call.1} parent=5 // pred_check_branch
        %230 = sbr.rel (%p228) target = $region40
      $region39: #{tpu_custom_call.1} parent=5 // pred_region
        // Predicated region
        $region41: #{tpu_custom_call.1} parent=39 // pred_check
          %p231 = pneg %p36
        $region42: #{tpu_custom_call.1} parent=39 // pred_check_branch
          %233 = sbr.rel (%p231) target = $region44
        $region43: #{tpu_custom_call.1} parent=39 // pred_region
          %p234 = scmp.lt.s32.totalorder %s16, 1
          %s235 = scalar_select %p234, %s16, 1
          %s236 = smul.addr %s235, 8
          %s237 = scalar_lea.vmem %s0, %s236
        $region44: #{tpu_custom_call.1} parent=39 // pred_fallthru
          _
      $region40: #{tpu_custom_call.1} parent=5 // pred_fallthru
        _
      %p238 = scmp.le.s32.totalorder 1, %s16
      %p239 = scmp.lt.s32.totalorder %s16, 3
      %p240 = pnand %p238, %p239
      %p241 = pneg %p240
      // Predicated region
      $region45: #{tpu_custom_call.1} parent=5 // pred_check
        _
      $region46: #{tpu_custom_call.1} parent=5 // pred_check_branch
        %243 = sbr.rel (%p240) target = $region48
      $region47: #{tpu_custom_call.1} parent=5 // pred_region
        %s244 = ssub.s32 %s16, 1
        %p245 = scmp.lt.s32.totalorder %s21, 1
        %s246 = scalar_select %p245, %s21, 1
        %s247 = smul.addr %s246, 8
        %s248 = scalar_lea.vmem %s0, %s247
        %p249 = pneg %p42
        %p250 = pneg %p39
        %p251 = pneg %p63
        %p252 = pneg %p60
        %p253 = pneg %p84
        %p254 = pneg %p81
        %p255 = pneg %p105
        %p256 = pneg %p102
        %p257 = pneg %p126
        %p258 = pneg %p123
        %p259 = pneg %p147
        %p260 = pneg %p144
        %p261 = pneg %p168
        %p262 = pneg %p165
        %p263 = pneg %p194
        %p264 = pneg %p191
        %s265 = sand.u32 %s181, 1
        %s266 = scalar_lea.sflag [#allocation4], %s265
        %s267 = sand.u32 %s181, 1
        %s268 = smul.addr %s267, 8
        %s269 = scalar_lea.vmem [#allocation3], %s268
        %p270 = scmp.lt.s32.totalorder %s21, 1
        %s271 = scalar_select %p270, %s21, 1
        %s272 = smul.addr %s271, 8
        %s273 = scalar_lea.vmem %s0, %s272
        %v274 = vld [vmem:[%s273] sm:$0xff]
        %v275 = vld [vmem:[%s1] sm:$0x1]
        %v276 = vld [vmem:[%s2] sm:$0x1]
        %vm277 = vcmask 261120
        %v278 = vsel %vm277, %v274, 0.0
        %279 = vadd.xlane.f32.xlu0 %v278
        %v280 = vpop.xlane.xlu0 %279
        %v281 = vrcp.pop 32.0
        %v282 = vmul.f32 %v280, %v281
        %v283 = vsub.f32 %v274, %v282
        %v284 = vmul.f32 %v283, %v283
        %v285 = vsel %vm277, %v284, 0.0
        %286 = vadd.xlane.f32.xlu0 %v285
        %v287 = vpop.xlane.xlu0 %286
        %v288 = vrcp.pop 31.0
        %v289 = vmul.f32 %v287, %v288
        %v291 = vlaneseq
        %v292 = vshrl.u32 %v291, 7
        %v293 = vsub.s32 0, %v292
        %v294 = vrot.slane %v275, %v293
        %v296 = vmul.f32 %v294, %v283
        %v297 = vrsqrt.pop %v289
        %v298 = vmul.f32 %v289, %v297
        %vm299 = vcmp.eq.f32.partialorder %v289, inf
        %v300 = vsel %vm299, %v289, %v298
        %vm301 = vcmp.eq.f32.partialorder %v289, 0.0
        %v302 = vand.u32 %v289, 2147483648
        %v303 = vsel %vm301, %v302, %v300
        %v304 = vadd.f32 %v303, 1e-06
        %v305 = vrcp.pop %v304
        %v306 = vmul.f32 %v296, %v305
        %v308 = vlaneseq
        %v309 = vshrl.u32 %v308, 7
        %v310 = vsub.s32 0, %v309
        %v311 = vrot.slane %v276, %v310
        %v313 = vadd.f32 %v306, %v311
        %v314 = vld [vmem:[%s3] sm:$0xff]
        %v315 = vld [vmem:[%s3 + $0x8] sm:$0xff]
        %v316 = vld [vmem:[%s3 + $0x10] sm:$0xff]
        %v317 = vld [vmem:[%s3 + $0x18] sm:$0xff]
        %v318 = vld [vmem:[%s3 + $0x20] sm:$0xff]
        %v319 = vld [vmem:[%s3 + $0x28] sm:$0xff]
        %v320 = vld [vmem:[%s3 + $0x30] sm:$0xff]
        %v321 = vld [vmem:[%s3 + $0x38] sm:$0xff]
        %v322 = vld [vmem:[%s3 + $0x40] sm:$0xff]
        %v323 = vld [vmem:[%s3 + $0x48] sm:$0xff]
        %v324 = vld [vmem:[%s3 + $0x50] sm:$0xff]
        %v325 = vld [vmem:[%s3 + $0x58] sm:$0xff]
        %v326 = vld [vmem:[%s3 + $0x60] sm:$0xff]
        %v327 = vld [vmem:[%s3 + $0x68] sm:$0xff]
        %v328 = vld [vmem:[%s3 + $0x70] sm:$0xff]
        %v329 = vld [vmem:[%s3 + $0x78] sm:$0xff]
        %v330 = vld [vmem:[%s3 + $0x80] sm:$0xff]
        %v331 = vld [vmem:[%s3 + $0x88] sm:$0xff]
        %v332 = vld [vmem:[%s3 + $0x90] sm:$0xff]
        %v333 = vld [vmem:[%s3 + $0x98] sm:$0xff]
        %v334 = vld [vmem:[%s3 + $0xa0] sm:$0xff]
        %v335 = vld [vmem:[%s3 + $0xa8] sm:$0xff]
        %v336 = vld [vmem:[%s3 + $0xb0] sm:$0xff]
        %v337 = vld [vmem:[%s3 + $0xb8] sm:$0xff]
        %v338 = vld [vmem:[%s3 + $0xc0] sm:$0xff]
        %v339 = vld [vmem:[%s3 + $0xc8] sm:$0xff]
        %v340 = vld [vmem:[%s3 + $0xd0] sm:$0xff]
        %v341 = vld [vmem:[%s3 + $0xd8] sm:$0xff]
        %v342 = vld [vmem:[%s3 + $0xe0] sm:$0xff]
        %v343 = vld [vmem:[%s3 + $0xe8] sm:$0xff]
        %v344 = vld [vmem:[%s3 + $0xf0] sm:$0xff]
        %v345 = vld [vmem:[%s3 + $0xf8] sm:$0xff]
        %v346 = vld [vmem:[%s3 + $0x100] sm:$0xff]
        %v347 = vld [vmem:[%s3 + $0x108] sm:$0xff]
        %v348 = vld [vmem:[%s3 + $0x110] sm:$0xff]
        %v349 = vld [vmem:[%s3 + $0x118] sm:$0xff]
        %v350 = vld [vmem:[%s3 + $0x120] sm:$0xff]
        %v351 = vld [vmem:[%s3 + $0x128] sm:$0xff]
        %v352 = vld [vmem:[%s3 + $0x130] sm:$0xff]
        %v353 = vld [vmem:[%s3 + $0x138] sm:$0xff]
        %v354 = vld [vmem:[%s3 + $0x140] sm:$0xff]
        %v355 = vld [vmem:[%s3 + $0x148] sm:$0xff]
        %v356 = vld [vmem:[%s3 + $0x150] sm:$0xff]
        %v357 = vld [vmem:[%s3 + $0x158] sm:$0xff]
        %v358 = vld [vmem:[%s3 + $0x160] sm:$0xff]
        %v359 = vld [vmem:[%s3 + $0x168] sm:$0xff]
        %v360 = vld [vmem:[%s3 + $0x170] sm:$0xff]
        %v361 = vld [vmem:[%s3 + $0x178] sm:$0xff]
        %v362 = vld [vmem:[%s4] sm:$0xff]
        %v363 = vld [vmem:[%s4 + $0x8] sm:$0xf]
        %v366 = vlaneseq
        %v367 = vshrl.u32 %v366, 7
        %v368 = vsub.s32 0, %v367
        %v369 = vrot.slane %v362, %v368
        %v370 = vlaneseq
        %v371 = vshrl.u32 %v370, 7
        %v372 = vsub.s32 1, %v371
        %v373 = vrot.slane %v362, %v372
        %v374 = vlaneseq
        %v375 = vshrl.u32 %v374, 7
        %v376 = vsub.s32 2, %v375
        %v377 = vrot.slane %v362, %v376
        %v378 = vlaneseq
        %v379 = vshrl.u32 %v378, 7
        %v380 = vsub.s32 3, %v379
        %v381 = vrot.slane %v362, %v380
        %v382 = vlaneseq
        %v383 = vshrl.u32 %v382, 7
        %v384 = vsub.s32 4, %v383
        %v385 = vrot.slane %v362, %v384
        %v386 = vlaneseq
        %v387 = vshrl.u32 %v386, 7
        %v388 = vsub.s32 5, %v387
        %v389 = vrot.slane %v362, %v388
        %v390 = vlaneseq
        %v391 = vshrl.u32 %v390, 7
        %v392 = vsub.s32 6, %v391
        %v393 = vrot.slane %v362, %v392
        %v394 = vlaneseq
        %v395 = vshrl.u32 %v394, 7
        %v396 = vsub.s32 7, %v395
        %v397 = vrot.slane %v362, %v396
        %v398 = vlaneseq
        %v399 = vshrl.u32 %v398, 7
        %v400 = vsub.s32 0, %v399
        %v401 = vrot.slane %v363, %v400
        %v402 = vlaneseq
        %v403 = vshrl.u32 %v402, 7
        %v404 = vsub.s32 1, %v403
        %v405 = vrot.slane %v363, %v404
        %v406 = vlaneseq
        %v407 = vshrl.u32 %v406, 7
        %v408 = vsub.s32 2, %v407
        %v409 = vrot.slane %v363, %v408
        %v410 = vlaneseq
        %v411 = vshrl.u32 %v410, 7
        %v412 = vsub.s32 3, %v411
        %v413 = vrot.slane %v363, %v412
        %v427 = vsel %vm277, %v313, 0
        %429 = vmatprep.subr.mxu0 0.0
        %430 = vmatpush1.msra.mxu0 0.0
        %431 = vmatprep.subr.mxu0 0.0
        %432 = vmatpush1.msra.mxu0 0.0
        %433 = vmatprep.subr.mxu0 0.0
        %434 = vmatpush1.msra.mxu0 0.0
        %435 = vmatprep.subr.mxu0 0.0
        %436 = vmatpush1.msra.mxu0 0.0
        %437 = vmatprep.subr.mxu0 0.0
        %438 = vmatpush1.msra.mxu0 0.0
        %439 = vmatprep.subr.mxu0 0.0
        %440 = vmatpush1.msra.mxu0 0.0
        %441 = vmatprep.subr.mxu0 0.0
        %442 = vmatpush1.msra.mxu0 0.0
        %443 = vmatprep.subr.mxu0 0.0
        %444 = vmatpush1.msra.mxu0 0.0
        %445 = vmatprep.subr.mxu0 0.0
        %446 = vmatpush1.msra.mxu0 0.0
        %447 = vmatprep.subr.mxu0 0.0
        %448 = vmatpush1.msra.mxu0 0.0
        %449 = vmatprep.subr.mxu0 0.0
        %450 = vmatpush1.msra.mxu0 0.0
        %451 = vmatprep.subr.mxu0 0.0
        %452 = vmatpush1.msra.mxu0 0.0
        %453 = vmatprep.subr.mxu0 %v351
        %454 = vmatpush1.msra.mxu0 %v350
        %455 = vmatprep.subr.mxu0 %v339
        %456 = vmatpush1.msra.mxu0 %v338
        %457 = vmatprep.subr.mxu0 %v327
        %458 = vmatpush1.msra.mxu0 %v326
        %459 = vmatprep.subr.mxu0 %v315
        %460 = vmatpush1.msra.mxu0 %v314
        %461 = vmatprep.subr.mxu0 0.0
        %462 = vmatpush2.msra.mxu0 0.0
        %463 = vmatprep.subr.mxu0 0.0
        %464 = vmatpush2.msra.mxu0 0.0
        %465 = vmatprep.subr.mxu0 0.0
        %466 = vmatpush2.msra.mxu0 0.0
        %467 = vmatprep.subr.mxu0 0.0
        %468 = vmatpush2.msra.mxu0 0.0
        %469 = vmatprep.subr.mxu0 0.0
        %470 = vmatpush2.msra.mxu0 0.0
        %471 = vmatprep.subr.mxu0 0.0
        %472 = vmatpush2.msra.mxu0 0.0
        %473 = vmatprep.subr.mxu0 0.0
        %474 = vmatpush2.msra.mxu0 0.0
        %475 = vmatprep.subr.mxu0 0.0
        %476 = vmatpush2.msra.mxu0 0.0
        %477 = vmatprep.subr.mxu0 0.0
        %478 = vmatpush2.msra.mxu0 0.0
        %479 = vmatprep.subr.mxu0 0.0
        %480 = vmatpush2.msra.mxu0 0.0
        %481 = vmatprep.subr.mxu0 0.0
        %482 = vmatpush2.msra.mxu0 0.0
        %483 = vmatprep.subr.mxu0 0.0
        %484 = vmatpush2.msra.mxu0 0.0
        %485 = vmatprep.subr.mxu0 0.0
        %486 = vmatpush2.msra.mxu0 0.0
        %487 = vmatprep.subr.mxu0 0.0
        %488 = vmatpush2.msra.mxu0 0.0
        %489 = vmatprep.subr.mxu0 0.0
        %490 = vmatpush2.msra.mxu0 0.0
        %491 = vmatprep.subr.mxu0 0.0
        %492 = vmatpush2.msra.mxu0 0.0
        %493 = vmatprep.mubr.f32.mxu0 0.0
        %494 = vmatmul.mubr.f32.gmra.mxu0 %v427
        %v495 = vpop.f32.mrf.mxu0
        %v496 = vadd.f32 %v369, %v495
        %v497 = vpop.f32.mrf.mxu0
        %v498 = vadd.f32 %v373, %v497
        %499 = vdwg.mxu0
        %500 = vmatprep.subr.mxu0 0.0
        %501 = vmatpush1.msra.mxu0 0.0
        %502 = vmatprep.subr.mxu0 0.0
        %503 = vmatpush1.msra.mxu0 0.0
        %504 = vmatprep.subr.mxu0 0.0
        %505 = vmatpush1.msra.mxu0 0.0
        %506 = vmatprep.subr.mxu0 0.0
        %507 = vmatpush1.msra.mxu0 0.0
        %508 = vmatprep.subr.mxu0 0.0
        %509 = vmatpush1.msra.mxu0 0.0
        %510 = vmatprep.subr.mxu0 0.0
        %511 = vmatpush1.msra.mxu0 0.0
        %512 = vmatprep.subr.mxu0 0.0
        %513 = vmatpush1.msra.mxu0 0.0
        %514 = vmatprep.subr.mxu0 0.0
        %515 = vmatpush1.msra.mxu0 0.0
        %516 = vmatprep.subr.mxu0 0.0
        %517 = vmatpush1.msra.mxu0 0.0
        %518 = vmatprep.subr.mxu0 0.0
        %519 = vmatpush1.msra.mxu0 0.0
        %520 = vmatprep.subr.mxu0 0.0
        %521 = vmatpush1.msra.mxu0 0.0
        %522 = vmatprep.subr.mxu0 0.0
        %523 = vmatpush1.msra.mxu0 0.0
        %524 = vmatprep.subr.mxu0 %v353
        %525 = vmatpush1.msra.mxu0 %v352
        %526 = vmatprep.subr.mxu0 %v341
        %527 = vmatpush1.msra.mxu0 %v340
        %528 = vmatprep.subr.mxu0 %v329
        %529 = vmatpush1.msra.mxu0 %v328
        %530 = vmatprep.subr.mxu0 %v317
        %531 = vmatpush1.msra.mxu0 %v316
        %532 = vmatprep.subr.mxu0 0.0
        %533 = vmatpush2.msra.mxu0 0.0
        %534 = vmatprep.subr.mxu0 0.0
        %535 = vmatpush2.msra.mxu0 0.0
        %536 = vmatprep.subr.mxu0 0.0
        %537 = vmatpush2.msra.mxu0 0.0
        %538 = vmatprep.subr.mxu0 0.0
        %539 = vmatpush2.msra.mxu0 0.0
        %540 = vmatprep.subr.mxu0 0.0
        %541 = vmatpush2.msra.mxu0 0.0
        %542 = vmatprep.subr.mxu0 0.0
        %543 = vmatpush2.msra.mxu0 0.0
        %544 = vmatprep.subr.mxu0 0.0
        %545 = vmatpush2.msra.mxu0 0.0
        %546 = vmatprep.subr.mxu0 0.0
        %547 = vmatpush2.msra.mxu0 0.0
        %548 = vmatprep.subr.mxu0 0.0
        %549 = vmatpush2.msra.mxu0 0.0
        %550 = vmatprep.subr.mxu0 0.0
        %551 = vmatpush2.msra.mxu0 0.0
        %552 = vmatprep.subr.mxu0 0.0
        %553 = vmatpush2.msra.mxu0 0.0
        %554 = vmatprep.subr.mxu0 0.0
        %555 = vmatpush2.msra.mxu0 0.0
        %556 = vmatprep.subr.mxu0 0.0
        %557 = vmatpush2.msra.mxu0 0.0
        %558 = vmatprep.subr.mxu0 0.0
        %559 = vmatpush2.msra.mxu0 0.0
        %560 = vmatprep.subr.mxu0 0.0
        %561 = vmatpush2.msra.mxu0 0.0
        %562 = vmatprep.subr.mxu0 0.0
        %563 = vmatpush2.msra.mxu0 0.0
        %564 = vmatprep.mubr.f32.mxu0 0.0
        %565 = vmatmul.mubr.f32.gmra.mxu0 %v427
        %v566 = vpop.f32.mrf.mxu0
        %v567 = vadd.f32 %v377, %v566
        %v568 = vpop.f32.mrf.mxu0
        %v569 = vadd.f32 %v381, %v568
        %570 = vdwg.mxu0
        %571 = vmatprep.subr.mxu0 0.0
        %572 = vmatpush1.msra.mxu0 0.0
        %573 = vmatprep.subr.mxu0 0.0
        %574 = vmatpush1.msra.mxu0 0.0
        %575 = vmatprep.subr.mxu0 0.0
        %576 = vmatpush1.msra.mxu0 0.0
        %577 = vmatprep.subr.mxu0 0.0
        %578 = vmatpush1.msra.mxu0 0.0
        %579 = vmatprep.subr.mxu0 0.0
        %580 = vmatpush1.msra.mxu0 0.0
        %581 = vmatprep.subr.mxu0 0.0
        %582 = vmatpush1.msra.mxu0 0.0
        %583 = vmatprep.subr.mxu0 0.0
        %584 = vmatpush1.msra.mxu0 0.0
        %585 = vmatprep.subr.mxu0 0.0
        %586 = vmatpush1.msra.mxu0 0.0
        %587 = vmatprep.subr.mxu0 0.0
        %588 = vmatpush1.msra.mxu0 0.0
        %589 = vmatprep.subr.mxu0 0.0
        %590 = vmatpush1.msra.mxu0 0.0
        %591 = vmatprep.subr.mxu0 0.0
        %592 = vmatpush1.msra.mxu0 0.0
        %593 = vmatprep.subr.mxu0 0.0
        %594 = vmatpush1.msra.mxu0 0.0
        %595 = vmatprep.subr.mxu0 %v355
        %596 = vmatpush1.msra.mxu0 %v354
        %597 = vmatprep.subr.mxu0 %v343
        %598 = vmatpush1.msra.mxu0 %v342
        %599 = vmatprep.subr.mxu0 %v331
        %600 = vmatpush1.msra.mxu0 %v330
        %601 = vmatprep.subr.mxu0 %v319
        %602 = vmatpush1.msra.mxu0 %v318
        %603 = vmatprep.subr.mxu0 0.0
        %604 = vmatpush2.msra.mxu0 0.0
        %605 = vmatprep.subr.mxu0 0.0
        %606 = vmatpush2.msra.mxu0 0.0
        %607 = vmatprep.subr.mxu0 0.0
        %608 = vmatpush2.msra.mxu0 0.0
        %609 = vmatprep.subr.mxu0 0.0
        %610 = vmatpush2.msra.mxu0 0.0
        %611 = vmatprep.subr.mxu0 0.0
        %612 = vmatpush2.msra.mxu0 0.0
        %613 = vmatprep.subr.mxu0 0.0
        %614 = vmatpush2.msra.mxu0 0.0
        %615 = vmatprep.subr.mxu0 0.0
        %616 = vmatpush2.msra.mxu0 0.0
        %617 = vmatprep.subr.mxu0 0.0
        %618 = vmatpush2.msra.mxu0 0.0
        %619 = vmatprep.subr.mxu0 0.0
        %620 = vmatpush2.msra.mxu0 0.0
        %621 = vmatprep.subr.mxu0 0.0
        %622 = vmatpush2.msra.mxu0 0.0
        %623 = vmatprep.subr.mxu0 0.0
        %624 = vmatpush2.msra.mxu0 0.0
        %625 = vmatprep.subr.mxu0 0.0
        %626 = vmatpush2.msra.mxu0 0.0
        %627 = vmatprep.subr.mxu0 0.0
        %628 = vmatpush2.msra.mxu0 0.0
        %629 = vmatprep.subr.mxu0 0.0
        %630 = vmatpush2.msra.mxu0 0.0
        %631 = vmatprep.subr.mxu0 0.0
        %632 = vmatpush2.msra.mxu0 0.0
        %633 = vmatprep.subr.mxu0 0.0
        %634 = vmatpush2.msra.mxu0 0.0
        %635 = vmatprep.mubr.f32.mxu0 0.0
        %636 = vmatmul.mubr.f32.gmra.mxu0 %v427
        %v637 = vpop.f32.mrf.mxu0
        %v638 = vadd.f32 %v385, %v637
        %v639 = vpop.f32.mrf.mxu0
        %v640 = vadd.f32 %v389, %v639
        %641 = vdwg.mxu0
        %642 = vmatprep.subr.mxu0 0.0
        %643 = vmatpush1.msra.mxu0 0.0
        %644 = vmatprep.subr.mxu0 0.0
        %645 = vmatpush1.msra.mxu0 0.0
        %646 = vmatprep.subr.mxu0 0.0
        %647 = vmatpush1.msra.mxu0 0.0
        %648 = vmatprep.subr.mxu0 0.0
        %649 = vmatpush1.msra.mxu0 0.0
        %650 = vmatprep.subr.mxu0 0.0
        %651 = vmatpush1.msra.mxu0 0.0
        %652 = vmatprep.subr.mxu0 0.0
        %653 = vmatpush1.msra.mxu0 0.0
        %654 = vmatprep.subr.mxu0 0.0
        %655 = vmatpush1.msra.mxu0 0.0
        %656 = vmatprep.subr.mxu0 0.0
        %657 = vmatpush1.msra.mxu0 0.0
        %658 = vmatprep.subr.mxu0 0.0
        %659 = vmatpush1.msra.mxu0 0.0
        %660 = vmatprep.subr.mxu0 0.0
        %661 = vmatpush1.msra.mxu0 0.0
        %662 = vmatprep.subr.mxu0 0.0
        %663 = vmatpush1.msra.mxu0 0.0
        %664 = vmatprep.subr.mxu0 0.0
        %665 = vmatpush1.msra.mxu0 0.0
        %666 = vmatprep.subr.mxu0 %v357
        %667 = vmatpush1.msra.mxu0 %v356
        %668 = vmatprep.subr.mxu0 %v345
        %669 = vmatpush1.msra.mxu0 %v344
        %670 = vmatprep.subr.mxu0 %v333
        %671 = vmatpush1.msra.mxu0 %v332
        %672 = vmatprep.subr.mxu0 %v321
        %673 = vmatpush1.msra.mxu0 %v320
        %674 = vmatprep.subr.mxu0 0.0
        %675 = vmatpush2.msra.mxu0 0.0
        %676 = vmatprep.subr.mxu0 0.0
        %677 = vmatpush2.msra.mxu0 0.0
        %678 = vmatprep.subr.mxu0 0.0
        %679 = vmatpush2.msra.mxu0 0.0
        %680 = vmatprep.subr.mxu0 0.0
        %681 = vmatpush2.msra.mxu0 0.0
        %682 = vmatprep.subr.mxu0 0.0
        %683 = vmatpush2.msra.mxu0 0.0
        %684 = vmatprep.subr.mxu0 0.0
        %685 = vmatpush2.msra.mxu0 0.0
        %686 = vmatprep.subr.mxu0 0.0
        %687 = vmatpush2.msra.mxu0 0.0
        %688 = vmatprep.subr.mxu0 0.0
        %689 = vmatpush2.msra.mxu0 0.0
        %690 = vmatprep.subr.mxu0 0.0
        %691 = vmatpush2.msra.mxu0 0.0
        %692 = vmatprep.subr.mxu0 0.0
        %693 = vmatpush2.msra.mxu0 0.0
        %694 = vmatprep.subr.mxu0 0.0
        %695 = vmatpush2.msra.mxu0 0.0
        %696 = vmatprep.subr.mxu0 0.0
        %697 = vmatpush2.msra.mxu0 0.0
        %698 = vmatprep.subr.mxu0 0.0
        %699 = vmatpush2.msra.mxu0 0.0
        %700 = vmatprep.subr.mxu0 0.0
        %701 = vmatpush2.msra.mxu0 0.0
        %702 = vmatprep.subr.mxu0 0.0
        %703 = vmatpush2.msra.mxu0 0.0
        %704 = vmatprep.subr.mxu0 0.0
        %705 = vmatpush2.msra.mxu0 0.0
        %706 = vmatprep.mubr.f32.mxu0 0.0
        %707 = vmatmul.mubr.f32.gmra.mxu0 %v427
        %v708 = vpop.f32.mrf.mxu0
        %v709 = vadd.f32 %v393, %v708
        %v710 = vpop.f32.mrf.mxu0
        %v711 = vadd.f32 %v397, %v710
        %712 = vdwg.mxu0
        %713 = vmatprep.subr.mxu0 0.0
        %714 = vmatpush1.msra.mxu0 0.0
        %715 = vmatprep.subr.mxu0 0.0
        %716 = vmatpush1.msra.mxu0 0.0
        %717 = vmatprep.subr.mxu0 0.0
        %718 = vmatpush1.msra.mxu0 0.0
        %719 = vmatprep.subr.mxu0 0.0
        %720 = vmatpush1.msra.mxu0 0.0
        %721 = vmatprep.subr.mxu0 0.0
        %722 = vmatpush1.msra.mxu0 0.0
        %723 = vmatprep.subr.mxu0 0.0
        %724 = vmatpush1.msra.mxu0 0.0
        %725 = vmatprep.subr.mxu0 0.0
        %726 = vmatpush1.msra.mxu0 0.0
        %727 = vmatprep.subr.mxu0 0.0
        %728 = vmatpush1.msra.mxu0 0.0
        %729 = vmatprep.subr.mxu0 0.0
        %730 = vmatpush1.msra.mxu0 0.0
        %731 = vmatprep.subr.mxu0 0.0
        %732 = vmatpush1.msra.mxu0 0.0
        %733 = vmatprep.subr.mxu0 0.0
        %734 = vmatpush1.msra.mxu0 0.0
        %735 = vmatprep.subr.mxu0 0.0
        %736 = vmatpush1.msra.mxu0 0.0
        %737 = vmatprep.subr.mxu0 %v359
        %738 = vmatpush1.msra.mxu0 %v358
        %739 = vmatprep.subr.mxu0 %v347
        %740 = vmatpush1.msra.mxu0 %v346
        %741 = vmatprep.subr.mxu0 %v335
        %742 = vmatpush1.msra.mxu0 %v334
        %743 = vmatprep.subr.mxu0 %v323
        %744 = vmatpush1.msra.mxu0 %v322
        %745 = vmatprep.subr.mxu0 0.0
        %746 = vmatpush2.msra.mxu0 0.0
        %747 = vmatprep.subr.mxu0 0.0
        %748 = vmatpush2.msra.mxu0 0.0
        %749 = vmatprep.subr.mxu0 0.0
        %750 = vmatpush2.msra.mxu0 0.0
        %751 = vmatprep.subr.mxu0 0.0
        %752 = vmatpush2.msra.mxu0 0.0
        %753 = vmatprep.subr.mxu0 0.0
        %754 = vmatpush2.msra.mxu0 0.0
        %755 = vmatprep.subr.mxu0 0.0
        %756 = vmatpush2.msra.mxu0 0.0
        %757 = vmatprep.subr.mxu0 0.0
        %758 = vmatpush2.msra.mxu0 0.0
        %759 = vmatprep.subr.mxu0 0.0
        %760 = vmatpush2.msra.mxu0 0.0
        %761 = vmatprep.subr.mxu0 0.0
        %762 = vmatpush2.msra.mxu0 0.0
        %763 = vmatprep.subr.mxu0 0.0
        %764 = vmatpush2.msra.mxu0 0.0
        %765 = vmatprep.subr.mxu0 0.0
        %766 = vmatpush2.msra.mxu0 0.0
        %767 = vmatprep.subr.mxu0 0.0
        %768 = vmatpush2.msra.mxu0 0.0
        %769 = vmatprep.subr.mxu0 0.0
        %770 = vmatpush2.msra.mxu0 0.0
        %771 = vmatprep.subr.mxu0 0.0
        %772 = vmatpush2.msra.mxu0 0.0
        %773 = vmatprep.subr.mxu0 0.0
        %774 = vmatpush2.msra.mxu0 0.0
        %775 = vmatprep.subr.mxu0 0.0
        %776 = vmatpush2.msra.mxu0 0.0
        %777 = vmatprep.mubr.f32.mxu0 0.0
        %778 = vmatmul.mubr.f32.gmra.mxu0 %v427
        %v779 = vpop.f32.mrf.mxu0
        %v780 = vadd.f32 %v401, %v779
        %v781 = vpop.f32.mrf.mxu0
        %v782 = vadd.f32 %v405, %v781
        %783 = vdwg.mxu0
        %784 = vmatprep.subr.mxu0 0.0
        %785 = vmatpush1.msra.mxu0 0.0
        %786 = vmatprep.subr.mxu0 0.0
        %787 = vmatpush1.msra.mxu0 0.0
        %788 = vmatprep.subr.mxu0 0.0
        %789 = vmatpush1.msra.mxu0 0.0
        %790 = vmatprep.subr.mxu0 0.0
        %791 = vmatpush1.msra.mxu0 0.0
        %792 = vmatprep.subr.mxu0 0.0
        %793 = vmatpush1.msra.mxu0 0.0
        %794 = vmatprep.subr.mxu0 0.0
        %795 = vmatpush1.msra.mxu0 0.0
        %796 = vmatprep.subr.mxu0 0.0
        %797 = vmatpush1.msra.mxu0 0.0
        %798 = vmatprep.subr.mxu0 0.0
        %799 = vmatpush1.msra.mxu0 0.0
        %800 = vmatprep.subr.mxu0 0.0
        %801 = vmatpush1.msra.mxu0 0.0
        %802 = vmatprep.subr.mxu0 0.0
        %803 = vmatpush1.msra.mxu0 0.0
        %804 = vmatprep.subr.mxu0 0.0
        %805 = vmatpush1.msra.mxu0 0.0
        %806 = vmatprep.subr.mxu0 0.0
        %807 = vmatpush1.msra.mxu0 0.0
        %808 = vmatprep.subr.mxu0 %v361
        %809 = vmatpush1.msra.mxu0 %v360
        %810 = vmatprep.subr.mxu0 %v349
        %811 = vmatpush1.msra.mxu0 %v348
        %812 = vmatprep.subr.mxu0 %v337
        %813 = vmatpush1.msra.mxu0 %v336
        %814 = vmatprep.subr.mxu0 %v325
        %815 = vmatpush1.msra.mxu0 %v324
        %816 = vmatprep.subr.mxu0 0.0
        %817 = vmatpush2.msra.mxu0 0.0
        %818 = vmatprep.subr.mxu0 0.0
        %819 = vmatpush2.msra.mxu0 0.0
        %820 = vmatprep.subr.mxu0 0.0
        %821 = vmatpush2.msra.mxu0 0.0
        %822 = vmatprep.subr.mxu0 0.0
        %823 = vmatpush2.msra.mxu0 0.0
        %824 = vmatprep.subr.mxu0 0.0
        %825 = vmatpush2.msra.mxu0 0.0
        %826 = vmatprep.subr.mxu0 0.0
        %827 = vmatpush2.msra.mxu0 0.0
        %828 = vmatprep.subr.mxu0 0.0
        %829 = vmatpush2.msra.mxu0 0.0
        %830 = vmatprep.subr.mxu0 0.0
        %831 = vmatpush2.msra.mxu0 0.0
        %832 = vmatprep.subr.mxu0 0.0
        %833 = vmatpush2.msra.mxu0 0.0
        %834 = vmatprep.subr.mxu0 0.0
        %835 = vmatpush2.msra.mxu0 0.0
        %836 = vmatprep.subr.mxu0 0.0
        %837 = vmatpush2.msra.mxu0 0.0
        %838 = vmatprep.subr.mxu0 0.0
        %839 = vmatpush2.msra.mxu0 0.0
        %840 = vmatprep.subr.mxu0 0.0
        %841 = vmatpush2.msra.mxu0 0.0
        %842 = vmatprep.subr.mxu0 0.0
        %843 = vmatpush2.msra.mxu0 0.0
        %844 = vmatprep.subr.mxu0 0.0
        %845 = vmatpush2.msra.mxu0 0.0
        %846 = vmatprep.subr.mxu0 0.0
        %847 = vmatpush2.msra.mxu0 0.0
        %848 = vmatprep.mubr.f32.mxu0 0.0
        %849 = vmatmul.mubr.f32.gmra.mxu0 %v427
        %v850 = vpop.f32.mrf.mxu0
        %v851 = vadd.f32 %v409, %v850
        %v852 = vpop.f32.mrf.mxu0
        %v853 = vadd.f32 %v413, %v852
        %854 = vdwg.mxu0
        %855 = vmatprep.subr.mxu0 0.0
        %856 = vmatpush1.xpose.msra.mxu0 0.0
        %857 = vmatprep.subr.mxu0 0.0
        %858 = vmatpush1.xpose.msra.mxu0 0.0
        %859 = vmatprep.subr.mxu0 0.0
        %860 = vmatpush1.xpose.msra.mxu0 0.0
        %861 = vmatprep.subr.mxu0 0.0
        %862 = vmatpush1.xpose.msra.mxu0 0.0
        %863 = vmatprep.subr.mxu0 0.0
        %864 = vmatpush1.xpose.msra.mxu0 0.0
        %865 = vmatprep.subr.mxu0 0.0
        %866 = vmatpush1.xpose.msra.mxu0 0.0
        %867 = vmatprep.subr.mxu0 0.0
        %868 = vmatpush1.xpose.msra.mxu0 0.0
        %869 = vmatprep.subr.mxu0 0.0
        %870 = vmatpush1.xpose.msra.mxu0 0.0
        %871 = vmatprep.subr.mxu0 0.0
        %872 = vmatpush1.xpose.msra.mxu0 0.0
        %873 = vmatprep.subr.mxu0 0.0
        %874 = vmatpush1.xpose.msra.mxu0 0.0
        %875 = vmatprep.subr.mxu0 0.0
        %876 = vmatpush1.xpose.msra.mxu0 0.0
        %877 = vmatprep.subr.mxu0 0.0
        %878 = vmatpush1.xpose.msra.mxu0 0.0
        %879 = vmatprep.subr.mxu0 0.0
        %880 = vmatpush1.xpose.msra.mxu0 0.0
        %881 = vmatprep.subr.mxu0 0.0
        %882 = vmatpush1.xpose.msra.mxu0 0.0
        %883 = vmatprep.subr.mxu0 0.0
        %884 = vmatpush1.xpose.msra.mxu0 0.0
        %885 = vmatprep.subr.mxu0 0.0
        %886 = vmatpush1.xpose.msra.mxu0 %v638
        %887 = vmatprep.subr.mxu0 0.0
        %888 = vmatpush2.xpose.msra.mxu0 0.0
        %889 = vmatprep.subr.mxu0 0.0
        %890 = vmatpush2.xpose.msra.mxu0 0.0
        %891 = vmatprep.subr.mxu0 0.0
        %892 = vmatpush2.xpose.msra.mxu0 0.0
        %893 = vmatprep.subr.mxu0 0.0
        %894 = vmatpush2.xpose.msra.mxu0 0.0
        %895 = vmatprep.subr.mxu0 0.0
        %896 = vmatpush2.xpose.msra.mxu0 0.0
        %897 = vmatprep.subr.mxu0 0.0
        %898 = vmatpush2.xpose.msra.mxu0 0.0
        %899 = vmatprep.subr.mxu0 0.0
        %900 = vmatpush2.xpose.msra.mxu0 0.0
        %901 = vmatprep.subr.mxu0 0.0
        %902 = vmatpush2.xpose.msra.mxu0 0.0
        %903 = vmatprep.subr.mxu0 0.0
        %904 = vmatpush2.xpose.msra.mxu0 0.0
        %905 = vmatprep.subr.mxu0 0.0
        %906 = vmatpush2.xpose.msra.mxu0 0.0
        %907 = vmatprep.subr.mxu0 0.0
        %908 = vmatpush2.xpose.msra.mxu0 0.0
        %909 = vmatprep.subr.mxu0 0.0
        %910 = vmatpush2.xpose.msra.mxu0 0.0
        %911 = vmatprep.subr.mxu0 0.0
        %912 = vmatpush2.xpose.msra.mxu0 0.0
        %913 = vmatprep.subr.mxu0 0.0
        %914 = vmatpush2.xpose.msra.mxu0 0.0
        %915 = vmatprep.subr.mxu0 0.0
        %916 = vmatpush2.xpose.msra.mxu0 0.0
        %917 = vmatprep.subr.mxu0 0.0
        %918 = vmatpush2.xpose.msra.mxu0 0.0
        %919 = vmatprep.mubr.f32.mxu0 0.0
        %920 = vmatmul.mubr.f32.gmra.mxu0 %v496
        %v921 = vpop.f32.mrf.mxu0
        %v922 = vadd.f32 0.0, %v921
        %v923 = vpop.f32.mrf.mxu0
        %924 = vdwg.mxu0
        %vm925 = vcmask 64512
        %v926 = vsel %vm925, %v922, -inf
        %927 = vmax.xlane.f32.xlu0 %v926
        %v928 = vpop.xlane.xlu0 %927
        %v929 = vsub.f32 %v922, %v928
        %v930 = vmul.f32 %v929, 1.442695
        %v931 = vpow.pop %v930
        %v932 = vsel %vm925, %v931, 0.0
        %933 = vadd.xlane.f32.xlu0 %v932
        %v934 = vpop.xlane.xlu0 %933
        %v935 = vrcp.pop %v934
        %v936 = vmul.f32 %v931, %v935
        %v938 = vsel %vm925, %v936, 0
        %940 = vmatprep.subr.mxu0 0.0
        %941 = vmatpush1.msra.mxu0 0.0
        %942 = vmatprep.subr.mxu0 0.0
        %943 = vmatpush1.msra.mxu0 0.0
        %944 = vmatprep.subr.mxu0 0.0
        %945 = vmatpush1.msra.mxu0 0.0
        %946 = vmatprep.subr.mxu0 0.0
        %947 = vmatpush1.msra.mxu0 0.0
        %948 = vmatprep.subr.mxu0 0.0
        %949 = vmatpush1.msra.mxu0 0.0
        %950 = vmatprep.subr.mxu0 0.0
        %951 = vmatpush1.msra.mxu0 0.0
        %952 = vmatprep.subr.mxu0 0.0
        %953 = vmatpush1.msra.mxu0 0.0
        %954 = vmatprep.subr.mxu0 0.0
        %955 = vmatpush1.msra.mxu0 0.0
        %956 = vmatprep.subr.mxu0 0.0
        %957 = vmatpush1.msra.mxu0 0.0
        %958 = vmatprep.subr.mxu0 0.0
        %959 = vmatpush1.msra.mxu0 0.0
        %960 = vmatprep.subr.mxu0 0.0
        %961 = vmatpush1.msra.mxu0 0.0
        %962 = vmatprep.subr.mxu0 0.0
        %963 = vmatpush1.msra.mxu0 0.0
        %964 = vmatprep.subr.mxu0 0.0
        %965 = vmatpush1.msra.mxu0 0.0
        %966 = vmatprep.subr.mxu0 0.0
        %967 = vmatpush1.msra.mxu0 0.0
        %968 = vmatprep.subr.mxu0 0.0
        %969 = vmatpush1.msra.mxu0 0.0
        %970 = vmatprep.subr.mxu0 0.0
        %971 = vmatpush1.msra.mxu0 %v780
        %972 = vmatprep.subr.mxu0 0.0
        %973 = vmatpush2.msra.mxu0 0.0
        %974 = vmatprep.subr.mxu0 0.0
        %975 = vmatpush2.msra.mxu0 0.0
        %976 = vmatprep.subr.mxu0 0.0
        %977 = vmatpush2.msra.mxu0 0.0
        %978 = vmatprep.subr.mxu0 0.0
        %979 = vmatpush2.msra.mxu0 0.0
        %980 = vmatprep.subr.mxu0 0.0
        %981 = vmatpush2.msra.mxu0 0.0
        %982 = vmatprep.subr.mxu0 0.0
        %983 = vmatpush2.msra.mxu0 0.0
        %984 = vmatprep.subr.mxu0 0.0
        %985 = vmatpush2.msra.mxu0 0.0
        %986 = vmatprep.subr.mxu0 0.0
        %987 = vmatpush2.msra.mxu0 0.0
        %988 = vmatprep.subr.mxu0 0.0
        %989 = vmatpush2.msra.mxu0 0.0
        %990 = vmatprep.subr.mxu0 0.0
        %991 = vmatpush2.msra.mxu0 0.0
        %992 = vmatprep.subr.mxu0 0.0
        %993 = vmatpush2.msra.mxu0 0.0
        %994 = vmatprep.subr.mxu0 0.0
        %995 = vmatpush2.msra.mxu0 0.0
        %996 = vmatprep.subr.mxu0 0.0
        %997 = vmatpush2.msra.mxu0 0.0
        %998 = vmatprep.subr.mxu0 0.0
        %999 = vmatpush2.msra.mxu0 0.0
        %1000 = vmatprep.subr.mxu0 0.0
        %1001 = vmatpush2.msra.mxu0 0.0
        %1002 = vmatprep.subr.mxu0 0.0
        %1003 = vmatpush2.msra.mxu0 0.0
        %1004 = vmatprep.mubr.f32.mxu0 0.0
        %1005 = vmatmul.mubr.f32.gmra.mxu0 %v938
        %v1006 = vpop.f32.mrf.mxu0
        %v1007 = vadd.f32 0.0, %v1006
        %v1008 = vpop.f32.mrf.mxu0
        %1009 = vdwg.mxu0
        %1010 = vst [vmem:[#allocation2] sm:$0xff] %v1007
        %1011 = vmatprep.subr.mxu0 0.0
        %1012 = vmatpush1.xpose.msra.mxu0 0.0
        %1013 = vmatprep.subr.mxu0 0.0
        %1014 = vmatpush1.xpose.msra.mxu0 0.0
        %1015 = vmatprep.subr.mxu0 0.0
        %1016 = vmatpush1.xpose.msra.mxu0 0.0
        %1017 = vmatprep.subr.mxu0 0.0
        %1018 = vmatpush1.xpose.msra.mxu0 0.0
        %1019 = vmatprep.subr.mxu0 0.0
        %1020 = vmatpush1.xpose.msra.mxu0 0.0
        %1021 = vmatprep.subr.mxu0 0.0
        %1022 = vmatpush1.xpose.msra.mxu0 0.0
        %1023 = vmatprep.subr.mxu0 0.0
        %1024 = vmatpush1.xpose.msra.mxu0 0.0
        %1025 = vmatprep.subr.mxu0 0.0
        %1026 = vmatpush1.xpose.msra.mxu0 0.0
        %1027 = vmatprep.subr.mxu0 0.0
        %1028 = vmatpush1.xpose.msra.mxu0 0.0
        %1029 = vmatprep.subr.mxu0 0.0
        %1030 = vmatpush1.xpose.msra.mxu0 0.0
        %1031 = vmatprep.subr.mxu0 0.0
        %1032 = vmatpush1.xpose.msra.mxu0 0.0
        %1033 = vmatprep.subr.mxu0 0.0
        %1034 = vmatpush1.xpose.msra.mxu0 0.0
        %1035 = vmatprep.subr.mxu0 0.0
        %1036 = vmatpush1.xpose.msra.mxu0 0.0
        %1037 = vmatprep.subr.mxu0 0.0
        %1038 = vmatpush1.xpose.msra.mxu0 0.0
        %1039 = vmatprep.subr.mxu0 0.0
        %1040 = vmatpush1.xpose.msra.mxu0 0.0
        %1041 = vmatprep.subr.mxu0 0.0
        %1042 = vmatpush1.xpose.msra.mxu0 %v640
        %1043 = vmatprep.subr.mxu0 0.0
        %1044 = vmatpush2.xpose.msra.mxu0 0.0
        %1045 = vmatprep.subr.mxu0 0.0
        %1046 = vmatpush2.xpose.msra.mxu0 0.0
        %1047 = vmatprep.subr.mxu0 0.0
        %1048 = vmatpush2.xpose.msra.mxu0 0.0
        %1049 = vmatprep.subr.mxu0 0.0
        %1050 = vmatpush2.xpose.msra.mxu0 0.0
        %1051 = vmatprep.subr.mxu0 0.0
        %1052 = vmatpush2.xpose.msra.mxu0 0.0
        %1053 = vmatprep.subr.mxu0 0.0
        %1054 = vmatpush2.xpose.msra.mxu0 0.0
        %1055 = vmatprep.subr.mxu0 0.0
        %1056 = vmatpush2.xpose.msra.mxu0 0.0
        %1057 = vmatprep.subr.mxu0 0.0
        %1058 = vmatpush2.xpose.msra.mxu0 0.0
        %1059 = vmatprep.subr.mxu0 0.0
        %1060 = vmatpush2.xpose.msra.mxu0 0.0
        %1061 = vmatprep.subr.mxu0 0.0
        %1062 = vmatpush2.xpose.msra.mxu0 0.0
        %1063 = vmatprep.subr.mxu0 0.0
        %1064 = vmatpush2.xpose.msra.mxu0 0.0
        %1065 = vmatprep.subr.mxu0 0.0
        %1066 = vmatpush2.xpose.msra.mxu0 0.0
        %1067 = vmatprep.subr.mxu0 0.0
        %1068 = vmatpush2.xpose.msra.mxu0 0.0
        %1069 = vmatprep.subr.mxu0 0.0
        %1070 = vmatpush2.xpose.msra.mxu0 0.0
        %1071 = vmatprep.subr.mxu0 0.0
        %1072 = vmatpush2.xpose.msra.mxu0 0.0
        %1073 = vmatprep.subr.mxu0 0.0
        %1074 = vmatpush2.xpose.msra.mxu0 0.0
        %1075 = vmatprep.mubr.f32.mxu0 0.0
        %1076 = vmatmul.mubr.f32.gmra.mxu0 %v498
        %v1077 = vpop.f32.mrf.mxu0
        %v1078 = vadd.f32 0.0, %v1077
        %v1079 = vpop.f32.mrf.mxu0
        %1080 = vdwg.mxu0
        %v1081 = vsel %vm925, %v1078, -inf
        %1082 = vmax.xlane.f32.xlu0 %v1081
        %v1083 = vpop.xlane.xlu0 %1082
        %v1084 = vsub.f32 %v1078, %v1083
        %v1085 = vmul.f32 %v1084, 1.442695
        %v1086 = vpow.pop %v1085
        %v1087 = vsel %vm925, %v1086, 0.0
        %1088 = vadd.xlane.f32.xlu0 %v1087
        %v1089 = vpop.xlane.xlu0 %1088
        %v1090 = vrcp.pop %v1089
        %v1091 = vmul.f32 %v1086, %v1090
        %v1093 = vsel %vm925, %v1091, 0
        %1095 = vmatprep.subr.mxu0 0.0
        %1096 = vmatpush1.msra.mxu0 0.0
        %1097 = vmatprep.subr.mxu0 0.0
        %1098 = vmatpush1.msra.mxu0 0.0
        %1099 = vmatprep.subr.mxu0 0.0
        %1100 = vmatpush1.msra.mxu0 0.0
        %1101 = vmatprep.subr.mxu0 0.0
        %1102 = vmatpush1.msra.mxu0 0.0
        %1103 = vmatprep.subr.mxu0 0.0
        %1104 = vmatpush1.msra.mxu0 0.0
        %1105 = vmatprep.subr.mxu0 0.0
        %1106 = vmatpush1.msra.mxu0 0.0
        %1107 = vmatprep.subr.mxu0 0.0
        %1108 = vmatpush1.msra.mxu0 0.0
        %1109 = vmatprep.subr.mxu0 0.0
        %1110 = vmatpush1.msra.mxu0 0.0
        %1111 = vmatprep.subr.mxu0 0.0
        %1112 = vmatpush1.msra.mxu0 0.0
        %1113 = vmatprep.subr.mxu0 0.0
        %1114 = vmatpush1.msra.mxu0 0.0
        %1115 = vmatprep.subr.mxu0 0.0
        %1116 = vmatpush1.msra.mxu0 0.0
        %1117 = vmatprep.subr.mxu0 0.0
        %1118 = vmatpush1.msra.mxu0 0.0
        %1119 = vmatprep.subr.mxu0 0.0
        %1120 = vmatpush1.msra.mxu0 0.0
        %1121 = vmatprep.subr.mxu0 0.0
        %1122 = vmatpush1.msra.mxu0 0.0
        %1123 = vmatprep.subr.mxu0 0.0
        %1124 = vmatpush1.msra.mxu0 0.0
        %1125 = vmatprep.subr.mxu0 0.0
        %1126 = vmatpush1.msra.mxu0 %v782
        %1127 = vmatprep.subr.mxu0 0.0
        %1128 = vmatpush2.msra.mxu0 0.0
        %1129 = vmatprep.subr.mxu0 0.0
        %1130 = vmatpush2.msra.mxu0 0.0
        %1131 = vmatprep.subr.mxu0 0.0
        %1132 = vmatpush2.msra.mxu0 0.0
        %1133 = vmatprep.subr.mxu0 0.0
        %1134 = vmatpush2.msra.mxu0 0.0
        %1135 = vmatprep.subr.mxu0 0.0
        %1136 = vmatpush2.msra.mxu0 0.0
        %1137 = vmatprep.subr.mxu0 0.0
        %1138 = vmatpush2.msra.mxu0 0.0
        %1139 = vmatprep.subr.mxu0 0.0
        %1140 = vmatpush2.msra.mxu0 0.0
        %1141 = vmatprep.subr.mxu0 0.0
        %1142 = vmatpush2.msra.mxu0 0.0
        %1143 = vmatprep.subr.mxu0 0.0
        %1144 = vmatpush2.msra.mxu0 0.0
        %1145 = vmatprep.subr.mxu0 0.0
        %1146 = vmatpush2.msra.mxu0 0.0
        %1147 = vmatprep.subr.mxu0 0.0
        %1148 = vmatpush2.msra.mxu0 0.0
        %1149 = vmatprep.subr.mxu0 0.0
        %1150 = vmatpush2.msra.mxu0 0.0
        %1151 = vmatprep.subr.mxu0 0.0
        %1152 = vmatpush2.msra.mxu0 0.0
        %1153 = vmatprep.subr.mxu0 0.0
        %1154 = vmatpush2.msra.mxu0 0.0
        %1155 = vmatprep.subr.mxu0 0.0
        %1156 = vmatpush2.msra.mxu0 0.0
        %1157 = vmatprep.subr.mxu0 0.0
        %1158 = vmatpush2.msra.mxu0 0.0
        %1159 = vmatprep.mubr.f32.mxu0 0.0
        %1160 = vmatmul.mubr.f32.gmra.mxu0 %v1093
        %v1161 = vpop.f32.mrf.mxu0
        %v1162 = vadd.f32 0.0, %v1161
        %v1163 = vpop.f32.mrf.mxu0
        %1164 = vdwg.mxu0
        %1165 = vst [vmem:[#allocation2 + $0x8] sm:$0xff] %v1162
        %1166 = vmatprep.subr.mxu0 0.0
        %1167 = vmatpush1.xpose.msra.mxu0 0.0
        %1168 = vmatprep.subr.mxu0 0.0
        %1169 = vmatpush1.xpose.msra.mxu0 0.0
        %1170 = vmatprep.subr.mxu0 0.0
        %1171 = vmatpush1.xpose.msra.mxu0 0.0
        %1172 = vmatprep.subr.mxu0 0.0
        %1173 = vmatpush1.xpose.msra.mxu0 0.0
        %1174 = vmatprep.subr.mxu0 0.0
        %1175 = vmatpush1.xpose.msra.mxu0 0.0
        %1176 = vmatprep.subr.mxu0 0.0
        %1177 = vmatpush1.xpose.msra.mxu0 0.0
        %1178 = vmatprep.subr.mxu0 0.0
        %1179 = vmatpush1.xpose.msra.mxu0 0.0
        %1180 = vmatprep.subr.mxu0 0.0
        %1181 = vmatpush1.xpose.msra.mxu0 0.0
        %1182 = vmatprep.subr.mxu0 0.0
        %1183 = vmatpush1.xpose.msra.mxu0 0.0
        %1184 = vmatprep.subr.mxu0 0.0
        %1185 = vmatpush1.xpose.msra.mxu0 0.0
        %1186 = vmatprep.subr.mxu0 0.0
        %1187 = vmatpush1.xpose.msra.mxu0 0.0
        %1188 = vmatprep.subr.mxu0 0.0
        %1189 = vmatpush1.xpose.msra.mxu0 0.0
        %1190 = vmatprep.subr.mxu0 0.0
        %1191 = vmatpush1.xpose.msra.mxu0 0.0
        %1192 = vmatprep.subr.mxu0 0.0
        %1193 = vmatpush1.xpose.msra.mxu0 0.0
        %1194 = vmatprep.subr.mxu0 0.0
        %1195 = vmatpush1.xpose.msra.mxu0 0.0
        %1196 = vmatprep.subr.mxu0 0.0
        %1197 = vmatpush1.xpose.msra.mxu0 %v709
        %1198 = vmatprep.subr.mxu0 0.0
        %1199 = vmatpush2.xpose.msra.mxu0 0.0
        %1200 = vmatprep.subr.mxu0 0.0
        %1201 = vmatpush2.xpose.msra.mxu0 0.0
        %1202 = vmatprep.subr.mxu0 0.0
        %1203 = vmatpush2.xpose.msra.mxu0 0.0
        %1204 = vmatprep.subr.mxu0 0.0
        %1205 = vmatpush2.xpose.msra.mxu0 0.0
        %1206 = vmatprep.subr.mxu0 0.0
        %1207 = vmatpush2.xpose.msra.mxu0 0.0
        %1208 = vmatprep.subr.mxu0 0.0
        %1209 = vmatpush2.xpose.msra.mxu0 0.0
        %1210 = vmatprep.subr.mxu0 0.0
        %1211 = vmatpush2.xpose.msra.mxu0 0.0
        %1212 = vmatprep.subr.mxu0 0.0
        %1213 = vmatpush2.xpose.msra.mxu0 0.0
        %1214 = vmatprep.subr.mxu0 0.0
        %1215 = vmatpush2.xpose.msra.mxu0 0.0
        %1216 = vmatprep.subr.mxu0 0.0
        %1217 = vmatpush2.xpose.msra.mxu0 0.0
        %1218 = vmatprep.subr.mxu0 0.0
        %1219 = vmatpush2.xpose.msra.mxu0 0.0
        %1220 = vmatprep.subr.mxu0 0.0
        %1221 = vmatpush2.xpose.msra.mxu0 0.0
        %1222 = vmatprep.subr.mxu0 0.0
        %1223 = vmatpush2.xpose.msra.mxu0 0.0
        %1224 = vmatprep.subr.mxu0 0.0
        %1225 = vmatpush2.xpose.msra.mxu0 0.0
        %1226 = vmatprep.subr.mxu0 0.0
        %1227 = vmatpush2.xpose.msra.mxu0 0.0
        %1228 = vmatprep.subr.mxu0 0.0
        %1229 = vmatpush2.xpose.msra.mxu0 0.0
        %1230 = vmatprep.mubr.f32.mxu0 0.0
        %1231 = vmatmul.mubr.f32.gmra.mxu0 %v567
        %v1232 = vpop.f32.mrf.mxu0
        %v1233 = vadd.f32 0.0, %v1232
        %v1234 = vpop.f32.mrf.mxu0
        %1235 = vdwg.mxu0
        %v1236 = vsel %vm925, %v1233, -inf
        %1237 = vmax.xlane.f32.xlu0 %v1236
        %v1238 = vpop.xlane.xlu0 %1237
        %v1239 = vsub.f32 %v1233, %v1238
        %v1240 = vmul.f32 %v1239, 1.442695
        %v1241 = vpow.pop %v1240
        %v1242 = vsel %vm925, %v1241, 0.0
        %1243 = vadd.xlane.f32.xlu0 %v1242
        %v1244 = vpop.xlane.xlu0 %1243
        %v1245 = vrcp.pop %v1244
        %v1246 = vmul.f32 %v1241, %v1245
        %v1248 = vsel %vm925, %v1246, 0
        %1250 = vmatprep.subr.mxu0 0.0
        %1251 = vmatpush1.msra.mxu0 0.0
        %1252 = vmatprep.subr.mxu0 0.0
        %1253 = vmatpush1.msra.mxu0 0.0
        %1254 = vmatprep.subr.mxu0 0.0
        %1255 = vmatpush1.msra.mxu0 0.0
        %1256 = vmatprep.subr.mxu0 0.0
        %1257 = vmatpush1.msra.mxu0 0.0
        %1258 = vmatprep.subr.mxu0 0.0
        %1259 = vmatpush1.msra.mxu0 0.0
        %1260 = vmatprep.subr.mxu0 0.0
        %1261 = vmatpush1.msra.mxu0 0.0
        %1262 = vmatprep.subr.mxu0 0.0
        %1263 = vmatpush1.msra.mxu0 0.0
        %1264 = vmatprep.subr.mxu0 0.0
        %1265 = vmatpush1.msra.mxu0 0.0
        %1266 = vmatprep.subr.mxu0 0.0
        %1267 = vmatpush1.msra.mxu0 0.0
        %1268 = vmatprep.subr.mxu0 0.0
        %1269 = vmatpush1.msra.mxu0 0.0
        %1270 = vmatprep.subr.mxu0 0.0
        %1271 = vmatpush1.msra.mxu0 0.0
        %1272 = vmatprep.subr.mxu0 0.0
        %1273 = vmatpush1.msra.mxu0 0.0
        %1274 = vmatprep.subr.mxu0 0.0
        %1275 = vmatpush1.msra.mxu0 0.0
        %1276 = vmatprep.subr.mxu0 0.0
        %1277 = vmatpush1.msra.mxu0 0.0
        %1278 = vmatprep.subr.mxu0 0.0
        %1279 = vmatpush1.msra.mxu0 0.0
        %1280 = vmatprep.subr.mxu0 0.0
        %1281 = vmatpush1.msra.mxu0 %v851
        %1282 = vmatprep.subr.mxu0 0.0
        %1283 = vmatpush2.msra.mxu0 0.0
        %1284 = vmatprep.subr.mxu0 0.0
        %1285 = vmatpush2.msra.mxu0 0.0
        %1286 = vmatprep.subr.mxu0 0.0
        %1287 = vmatpush2.msra.mxu0 0.0
        %1288 = vmatprep.subr.mxu0 0.0
        %1289 = vmatpush2.msra.mxu0 0.0
        %1290 = vmatprep.subr.mxu0 0.0
        %1291 = vmatpush2.msra.mxu0 0.0
        %1292 = vmatprep.subr.mxu0 0.0
        %1293 = vmatpush2.msra.mxu0 0.0
        %1294 = vmatprep.subr.mxu0 0.0
        %1295 = vmatpush2.msra.mxu0 0.0
        %1296 = vmatprep.subr.mxu0 0.0
        %1297 = vmatpush2.msra.mxu0 0.0
        %1298 = vmatprep.subr.mxu0 0.0
        %1299 = vmatpush2.msra.mxu0 0.0
        %1300 = vmatprep.subr.mxu0 0.0
        %1301 = vmatpush2.msra.mxu0 0.0
        %1302 = vmatprep.subr.mxu0 0.0
        %1303 = vmatpush2.msra.mxu0 0.0
        %1304 = vmatprep.subr.mxu0 0.0
        %1305 = vmatpush2.msra.mxu0 0.0
        %1306 = vmatprep.subr.mxu0 0.0
        %1307 = vmatpush2.msra.mxu0 0.0
        %1308 = vmatprep.subr.mxu0 0.0
        %1309 = vmatpush2.msra.mxu0 0.0
        %1310 = vmatprep.subr.mxu0 0.0
        %1311 = vmatpush2.msra.mxu0 0.0
        %1312 = vmatprep.subr.mxu0 0.0
        %1313 = vmatpush2.msra.mxu0 0.0
        %1314 = vmatprep.mubr.f32.mxu0 0.0
        %1315 = vmatmul.mubr.f32.gmra.mxu0 %v1248
        %v1316 = vpop.f32.mrf.mxu0
        %v1317 = vadd.f32 0.0, %v1316
        %v1318 = vpop.f32.mrf.mxu0
        %1319 = vdwg.mxu0
        %1320 = vst [vmem:[#allocation2 + $0x10] sm:$0xff] %v1317
        %1321 = vmatprep.subr.mxu0 0.0
        %1322 = vmatpush1.xpose.msra.mxu0 0.0
        %1323 = vmatprep.subr.mxu0 0.0
        %1324 = vmatpush1.xpose.msra.mxu0 0.0
        %1325 = vmatprep.subr.mxu0 0.0
        %1326 = vmatpush1.xpose.msra.mxu0 0.0
        %1327 = vmatprep.subr.mxu0 0.0
        %1328 = vmatpush1.xpose.msra.mxu0 0.0
        %1329 = vmatprep.subr.mxu0 0.0
        %1330 = vmatpush1.xpose.msra.mxu0 0.0
        %1331 = vmatprep.subr.mxu0 0.0
        %1332 = vmatpush1.xpose.msra.mxu0 0.0
        %1333 = vmatprep.subr.mxu0 0.0
        %1334 = vmatpush1.xpose.msra.mxu0 0.0
        %1335 = vmatprep.subr.mxu0 0.0
        %1336 = vmatpush1.xpose.msra.mxu0 0.0
        %1337 = vmatprep.subr.mxu0 0.0
        %1338 = vmatpush1.xpose.msra.mxu0 0.0
        %1339 = vmatprep.subr.mxu0 0.0
        %1340 = vmatpush1.xpose.msra.mxu0 0.0
        %1341 = vmatprep.subr.mxu0 0.0
        %1342 = vmatpush1.xpose.msra.mxu0 0.0
        %1343 = vmatprep.subr.mxu0 0.0
        %1344 = vmatpush1.xpose.msra.mxu0 0.0
        %1345 = vmatprep.subr.mxu0 0.0
        %1346 = vmatpush1.xpose.msra.mxu0 0.0
        %1347 = vmatprep.subr.mxu0 0.0
        %1348 = vmatpush1.xpose.msra.mxu0 0.0
        %1349 = vmatprep.subr.mxu0 0.0
        %1350 = vmatpush1.xpose.msra.mxu0 0.0
        %1351 = vmatprep.subr.mxu0 0.0
        %1352 = vmatpush1.xpose.msra.mxu0 %v711
        %1353 = vmatprep.subr.mxu0 0.0
        %1354 = vmatpush2.xpose.msra.mxu0 0.0
        %1355 = vmatprep.subr.mxu0 0.0
        %1356 = vmatpush2.xpose.msra.mxu0 0.0
        %1357 = vmatprep.subr.mxu0 0.0
        %1358 = vmatpush2.xpose.msra.mxu0 0.0
        %1359 = vmatprep.subr.mxu0 0.0
        %1360 = vmatpush2.xpose.msra.mxu0 0.0
        %1361 = vmatprep.subr.mxu0 0.0
        %1362 = vmatpush2.xpose.msra.mxu0 0.0
        %1363 = vmatprep.subr.mxu0 0.0
        %1364 = vmatpush2.xpose.msra.mxu0 0.0
        %1365 = vmatprep.subr.mxu0 0.0
        %1366 = vmatpush2.xpose.msra.mxu0 0.0
        %1367 = vmatprep.subr.mxu0 0.0
        %1368 = vmatpush2.xpose.msra.mxu0 0.0
        %1369 = vmatprep.subr.mxu0 0.0
        %1370 = vmatpush2.xpose.msra.mxu0 0.0
        %1371 = vmatprep.subr.mxu0 0.0
        %1372 = vmatpush2.xpose.msra.mxu0 0.0
        %1373 = vmatprep.subr.mxu0 0.0
        %1374 = vmatpush2.xpose.msra.mxu0 0.0
        %1375 = vmatprep.subr.mxu0 0.0
        %1376 = vmatpush2.xpose.msra.mxu0 0.0
        %1377 = vmatprep.subr.mxu0 0.0
        %1378 = vmatpush2.xpose.msra.mxu0 0.0
        %1379 = vmatprep.subr.mxu0 0.0
        %1380 = vmatpush2.xpose.msra.mxu0 0.0
        %1381 = vmatprep.subr.mxu0 0.0
        %1382 = vmatpush2.xpose.msra.mxu0 0.0
        %1383 = vmatprep.subr.mxu0 0.0
        %1384 = vmatpush2.xpose.msra.mxu0 0.0
        %1385 = vmatprep.mubr.f32.mxu0 0.0
        %1386 = vmatmul.mubr.f32.gmra.mxu0 %v569
        %v1387 = vpop.f32.mrf.mxu0
        %v1388 = vadd.f32 0.0, %v1387
        %v1389 = vpop.f32.mrf.mxu0
        %1390 = vdwg.mxu0
        %v1391 = vsel %vm925, %v1388, -inf
        %1392 = vmax.xlane.f32.xlu0 %v1391
        %v1393 = vpop.xlane.xlu0 %1392
        %v1394 = vsub.f32 %v1388, %v1393
        %v1395 = vmul.f32 %v1394, 1.442695
        %v1396 = vpow.pop %v1395
        %v1397 = vsel %vm925, %v1396, 0.0
        %1398 = vadd.xlane.f32.xlu0 %v1397
        %v1399 = vpop.xlane.xlu0 %1398
        %v1400 = vrcp.pop %v1399
        %v1401 = vmul.f32 %v1396, %v1400
        %v1403 = vsel %vm925, %v1401, 0
        %1405 = vmatprep.subr.mxu0 0.0
        %1406 = vmatpush1.msra.mxu0 0.0
        %1407 = vmatprep.subr.mxu0 0.0
        %1408 = vmatpush1.msra.mxu0 0.0
        %1409 = vmatprep.subr.mxu0 0.0
        %1410 = vmatpush1.msra.mxu0 0.0
        %1411 = vmatprep.subr.mxu0 0.0
        %1412 = vmatpush1.msra.mxu0 0.0
        %1413 = vmatprep.subr.mxu0 0.0
        %1414 = vmatpush1.msra.mxu0 0.0
        %1415 = vmatprep.subr.mxu0 0.0
        %1416 = vmatpush1.msra.mxu0 0.0
        %1417 = vmatprep.subr.mxu0 0.0
        %1418 = vmatpush1.msra.mxu0 0.0
        %1419 = vmatprep.subr.mxu0 0.0
        %1420 = vmatpush1.msra.mxu0 0.0
        %1421 = vmatprep.subr.mxu0 0.0
        %1422 = vmatpush1.msra.mxu0 0.0
        %1423 = vmatprep.subr.mxu0 0.0
        %1424 = vmatpush1.msra.mxu0 0.0
        %1425 = vmatprep.subr.mxu0 0.0
        %1426 = vmatpush1.msra.mxu0 0.0
        %1427 = vmatprep.subr.mxu0 0.0
        %1428 = vmatpush1.msra.mxu0 0.0
        %1429 = vmatprep.subr.mxu0 0.0
        %1430 = vmatpush1.msra.mxu0 0.0
        %1431 = vmatprep.subr.mxu0 0.0
        %1432 = vmatpush1.msra.mxu0 0.0
        %1433 = vmatprep.subr.mxu0 0.0
        %1434 = vmatpush1.msra.mxu0 0.0
        %1435 = vmatprep.subr.mxu0 0.0
        %1436 = vmatpush1.msra.mxu0 %v853
        %1437 = vmatprep.subr.mxu0 0.0
        %1438 = vmatpush2.msra.mxu0 0.0
        %1439 = vmatprep.subr.mxu0 0.0
        %1440 = vmatpush2.msra.mxu0 0.0
        %1441 = vmatprep.subr.mxu0 0.0
        %1442 = vmatpush2.msra.mxu0 0.0
        %1443 = vmatprep.subr.mxu0 0.0
        %1444 = vmatpush2.msra.mxu0 0.0
        %1445 = vmatprep.subr.mxu0 0.0
        %1446 = vmatpush2.msra.mxu0 0.0
        %1447 = vmatprep.subr.mxu0 0.0
        %1448 = vmatpush2.msra.mxu0 0.0
        %1449 = vmatprep.subr.mxu0 0.0
        %1450 = vmatpush2.msra.mxu0 0.0
        %1451 = vmatprep.subr.mxu0 0.0
        %1452 = vmatpush2.msra.mxu0 0.0
        %1453 = vmatprep.subr.mxu0 0.0
        %1454 = vmatpush2.msra.mxu0 0.0
        %1455 = vmatprep.subr.mxu0 0.0
        %1456 = vmatpush2.msra.mxu0 0.0
        %1457 = vmatprep.subr.mxu0 0.0
        %1458 = vmatpush2.msra.mxu0 0.0
        %1459 = vmatprep.subr.mxu0 0.0
        %1460 = vmatpush2.msra.mxu0 0.0
        %1461 = vmatprep.subr.mxu0 0.0
        %1462 = vmatpush2.msra.mxu0 0.0
        %1463 = vmatprep.subr.mxu0 0.0
        %1464 = vmatpush2.msra.mxu0 0.0
        %1465 = vmatprep.subr.mxu0 0.0
        %1466 = vmatpush2.msra.mxu0 0.0
        %1467 = vmatprep.subr.mxu0 0.0
        %1468 = vmatpush2.msra.mxu0 0.0
        %1469 = vmatprep.mubr.f32.mxu0 0.0
        %1470 = vmatmul.mubr.f32.gmra.mxu0 %v1403
        %v1471 = vpop.f32.mrf.mxu0
        %v1472 = vadd.f32 0.0, %v1471
        %v1473 = vpop.f32.mrf.mxu0
        %1474 = vdwg.mxu0
        %1475 = vst [vmem:[#allocation2 + $0x18] sm:$0xff] %v1472
        %v1476 = vld [vmem:[%s6] sm:$0x1]
        %v1478 = vlaneseq
        %v1479 = vshrl.u32 %v1478, 7
        %v1480 = vsub.s32 0, %v1479
        %v1481 = vrot.slane %v1476, %v1480
        %v1483 = vadd.f32 %v274, %v1481
        %v1484 = vld [vmem:[#allocation2] sm:$0xff]
        %v1485 = vld [vmem:[#allocation2 + $0x8] sm:$0xff]
        %v1486 = vld [vmem:[#allocation2 + $0x10] sm:$0xff]
        %v1487 = vld [vmem:[#allocation2 + $0x18] sm:$0xff]
        %v1488 = vld [vmem:[%s5] sm:$0xff]
        %v1489 = vld [vmem:[%s5 + $0x8] sm:$0xff]
        %v1490 = vld [vmem:[%s5 + $0x10] sm:$0xff]
        %v1491 = vld [vmem:[%s5 + $0x18] sm:$0xff]
        %v1492 = vld [vmem:[%s5 + $0x20] sm:$0xff]
        %v1493 = vld [vmem:[%s5 + $0x28] sm:$0xff]
        %v1494 = vld [vmem:[%s5 + $0x30] sm:$0xff]
        %v1495 = vld [vmem:[%s5 + $0x38] sm:$0xff]
        %v1496 = vld [vmem:[%s5 + $0x40] sm:$0xff]
        %v1497 = vld [vmem:[%s5 + $0x48] sm:$0xff]
        %v1498 = vld [vmem:[%s5 + $0x50] sm:$0xff]
        %v1499 = vld [vmem:[%s5 + $0x58] sm:$0xff]
        %v1500 = vld [vmem:[%s5 + $0x60] sm:$0xff]
        %v1501 = vld [vmem:[%s5 + $0x68] sm:$0xff]
        %v1502 = vld [vmem:[%s5 + $0x70] sm:$0xff]
        %v1503 = vld [vmem:[%s5 + $0x78] sm:$0xff]
        %v1504 = vld [vmem:[%s5 + $0x80] sm:$0xff]
        %v1505 = vld [vmem:[%s5 + $0x88] sm:$0xff]
        %v1506 = vld [vmem:[%s5 + $0x90] sm:$0xff]
        %v1507 = vld [vmem:[%s5 + $0x98] sm:$0xff]
        %v1508 = vld [vmem:[%s5 + $0xa0] sm:$0xff]
        %v1509 = vld [vmem:[%s5 + $0xa8] sm:$0xff]
        %v1510 = vld [vmem:[%s5 + $0xb0] sm:$0xff]
        %v1511 = vld [vmem:[%s5 + $0xb8] sm:$0xff]
        %v1512 = vld [vmem:[%s5 + $0xc0] sm:$0xff]
        %v1513 = vld [vmem:[%s5 + $0xc8] sm:$0xff]
        %v1514 = vld [vmem:[%s5 + $0xd0] sm:$0xff]
        %v1515 = vld [vmem:[%s5 + $0xd8] sm:$0xff]
        %v1516 = vld [vmem:[%s5 + $0xe0] sm:$0xff]
        %v1517 = vld [vmem:[%s5 + $0xe8] sm:$0xff]
        %v1518 = vld [vmem:[%s5 + $0xf0] sm:$0xff]
        %v1519 = vld [vmem:[%s5 + $0xf8] sm:$0xff]
        %v1520 = vld [vmem:[%s5 + $0x100] sm:$0xff]
        %v1521 = vld [vmem:[%s5 + $0x108] sm:$0xff]
        %v1522 = vld [vmem:[%s5 + $0x110] sm:$0xff]
        %v1523 = vld [vmem:[%s5 + $0x118] sm:$0xff]
        %v1524 = vld [vmem:[%s5 + $0x120] sm:$0xff]
        %v1525 = vld [vmem:[%s5 + $0x128] sm:$0xff]
        %v1526 = vld [vmem:[%s5 + $0x130] sm:$0xff]
        %v1527 = vld [vmem:[%s5 + $0x138] sm:$0xff]
        %v1528 = vld [vmem:[%s5 + $0x140] sm:$0xff]
        %v1529 = vld [vmem:[%s5 + $0x148] sm:$0xff]
        %v1530 = vld [vmem:[%s5 + $0x150] sm:$0xff]
        %v1531 = vld [vmem:[%s5 + $0x158] sm:$0xff]
        %v1532 = vld [vmem:[%s5 + $0x160] sm:$0xff]
        %v1533 = vld [vmem:[%s5 + $0x168] sm:$0xff]
        %v1534 = vld [vmem:[%s5 + $0x170] sm:$0xff]
        %v1535 = vld [vmem:[%s5 + $0x178] sm:$0xff]
        %v1536 = vld [vmem:[%s5 + $0x180] sm:$0xff]
        %v1537 = vld [vmem:[%s5 + $0x188] sm:$0xff]
        %v1538 = vld [vmem:[%s5 + $0x190] sm:$0xff]
        %v1539 = vld [vmem:[%s5 + $0x198] sm:$0xff]
        %v1540 = vld [vmem:[%s5 + $0x1a0] sm:$0xff]
        %v1541 = vld [vmem:[%s5 + $0x1a8] sm:$0xff]
        %v1542 = vld [vmem:[%s5 + $0x1b0] sm:$0xff]
        %v1543 = vld [vmem:[%s5 + $0x1b8] sm:$0xff]
        %v1544 = vld [vmem:[%s5 + $0x1c0] sm:$0xff]
        %v1545 = vld [vmem:[%s5 + $0x1c8] sm:$0xff]
        %v1546 = vld [vmem:[%s5 + $0x1d0] sm:$0xff]
        %v1547 = vld [vmem:[%s5 + $0x1d8] sm:$0xff]
        %v1548 = vld [vmem:[%s5 + $0x1e0] sm:$0xff]
        %v1549 = vld [vmem:[%s5 + $0x1e8] sm:$0xff]
        %v1550 = vld [vmem:[%s5 + $0x1f0] sm:$0xff]
        %v1551 = vld [vmem:[%s5 + $0x1f8] sm:$0xff]
        %1552 = vmatprep.subr.mxu0 0.0
        %1553 = vmatpush1.msra.mxu0 %v1503
        %1554 = vmatprep.subr.mxu0 0.0
        %1555 = vmatpush1.msra.mxu0 %v1502
        %1556 = vmatprep.subr.mxu0 0.0
        %1557 = vmatpush1.msra.mxu0 %v1501
        %1558 = vmatprep.subr.mxu0 0.0
        %1559 = vmatpush1.msra.mxu0 %v1500
        %1560 = vmatprep.subr.mxu0 0.0
        %1561 = vmatpush1.msra.mxu0 %v1499
        %1562 = vmatprep.subr.mxu0 0.0
        %1563 = vmatpush1.msra.mxu0 %v1498
        %1564 = vmatprep.subr.mxu0 0.0
        %1565 = vmatpush1.msra.mxu0 %v1497
        %1566 = vmatprep.subr.mxu0 0.0
        %1567 = vmatpush1.msra.mxu0 %v1496
        %1568 = vmatprep.subr.mxu0 0.0
        %1569 = vmatpush1.msra.mxu0 %v1495
        %1570 = vmatprep.subr.mxu0 0.0
        %1571 = vmatpush1.msra.mxu0 %v1494
        %1572 = vmatprep.subr.mxu0 0.0
        %1573 = vmatpush1.msra.mxu0 %v1493
        %1574 = vmatprep.subr.mxu0 0.0
        %1575 = vmatpush1.msra.mxu0 %v1492
        %1576 = vmatprep.subr.mxu0 0.0
        %1577 = vmatpush1.msra.mxu0 %v1491
        %1578 = vmatprep.subr.mxu0 0.0
        %1579 = vmatpush1.msra.mxu0 %v1490
        %1580 = vmatprep.subr.mxu0 0.0
        %1581 = vmatpush1.msra.mxu0 %v1489
        %1582 = vmatprep.subr.mxu0 0.0
        %1583 = vmatpush1.msra.mxu0 %v1488
        %1584 = vmatprep.subr.mxu0 0.0
        %1585 = vmatpush2.msra.mxu0 %v1519
        %1586 = vmatprep.subr.mxu0 0.0
        %1587 = vmatpush2.msra.mxu0 %v1518
        %1588 = vmatprep.subr.mxu0 0.0
        %1589 = vmatpush2.msra.mxu0 %v1517
        %1590 = vmatprep.subr.mxu0 0.0
        %1591 = vmatpush2.msra.mxu0 %v1516
        %1592 = vmatprep.subr.mxu0 0.0
        %1593 = vmatpush2.msra.mxu0 %v1515
        %1594 = vmatprep.subr.mxu0 0.0
        %1595 = vmatpush2.msra.mxu0 %v1514
        %1596 = vmatprep.subr.mxu0 0.0
        %1597 = vmatpush2.msra.mxu0 %v1513
        %1598 = vmatprep.subr.mxu0 0.0
        %1599 = vmatpush2.msra.mxu0 %v1512
        %1600 = vmatprep.subr.mxu0 0.0
        %1601 = vmatpush2.msra.mxu0 %v1511
        %1602 = vmatprep.subr.mxu0 0.0
        %1603 = vmatpush2.msra.mxu0 %v1510
        %1604 = vmatprep.subr.mxu0 0.0
        %1605 = vmatpush2.msra.mxu0 %v1509
        %1606 = vmatprep.subr.mxu0 0.0
        %1607 = vmatpush2.msra.mxu0 %v1508
        %1608 = vmatprep.subr.mxu0 0.0
        %1609 = vmatpush2.msra.mxu0 %v1507
        %1610 = vmatprep.subr.mxu0 0.0
        %1611 = vmatpush2.msra.mxu0 %v1506
        %1612 = vmatprep.subr.mxu0 0.0
        %1613 = vmatpush2.msra.mxu0 %v1505
        %1614 = vmatprep.subr.mxu0 0.0
        %1615 = vmatpush2.msra.mxu0 %v1504
        %1616 = vmatprep.mubr.f32.mxu0 %v1485
        %1617 = vmatmul.mubr.f32.gmra.mxu0 %v1484
        %v1618 = vpop.f32.mrf.mxu0
        %v1619 = vadd.f32 0.0, %v1618
        %v1620 = vpop.f32.mrf.mxu0
        %1621 = vdwg.mxu0
        %1622 = vmatprep.subr.mxu0 0.0
        %1623 = vmatpush1.msra.mxu0 %v1535
        %1624 = vmatprep.subr.mxu0 0.0
        %1625 = vmatpush1.msra.mxu0 %v1534
        %1626 = vmatprep.subr.mxu0 0.0
        %1627 = vmatpush1.msra.mxu0 %v1533
        %1628 = vmatprep.subr.mxu0 0.0
        %1629 = vmatpush1.msra.mxu0 %v1532
        %1630 = vmatprep.subr.mxu0 0.0
        %1631 = vmatpush1.msra.mxu0 %v1531
        %1632 = vmatprep.subr.mxu0 0.0
        %1633 = vmatpush1.msra.mxu0 %v1530
        %1634 = vmatprep.subr.mxu0 0.0
        %1635 = vmatpush1.msra.mxu0 %v1529
        %1636 = vmatprep.subr.mxu0 0.0
        %1637 = vmatpush1.msra.mxu0 %v1528
        %1638 = vmatprep.subr.mxu0 0.0
        %1639 = vmatpush1.msra.mxu0 %v1527
        %1640 = vmatprep.subr.mxu0 0.0
        %1641 = vmatpush1.msra.mxu0 %v1526
        %1642 = vmatprep.subr.mxu0 0.0
        %1643 = vmatpush1.msra.mxu0 %v1525
        %1644 = vmatprep.subr.mxu0 0.0
        %1645 = vmatpush1.msra.mxu0 %v1524
        %1646 = vmatprep.subr.mxu0 0.0
        %1647 = vmatpush1.msra.mxu0 %v1523
        %1648 = vmatprep.subr.mxu0 0.0
        %1649 = vmatpush1.msra.mxu0 %v1522
        %1650 = vmatprep.subr.mxu0 0.0
        %1651 = vmatpush1.msra.mxu0 %v1521
        %1652 = vmatprep.subr.mxu0 0.0
        %1653 = vmatpush1.msra.mxu0 %v1520
        %1654 = vmatprep.subr.mxu0 0.0
        %1655 = vmatpush2.msra.mxu0 %v1551
        %1656 = vmatprep.subr.mxu0 0.0
        %1657 = vmatpush2.msra.mxu0 %v1550
        %1658 = vmatprep.subr.mxu0 0.0
        %1659 = vmatpush2.msra.mxu0 %v1549
        %1660 = vmatprep.subr.mxu0 0.0
        %1661 = vmatpush2.msra.mxu0 %v1548
        %1662 = vmatprep.subr.mxu0 0.0
        %1663 = vmatpush2.msra.mxu0 %v1547
        %1664 = vmatprep.subr.mxu0 0.0
        %1665 = vmatpush2.msra.mxu0 %v1546
        %1666 = vmatprep.subr.mxu0 0.0
        %1667 = vmatpush2.msra.mxu0 %v1545
        %1668 = vmatprep.subr.mxu0 0.0
        %1669 = vmatpush2.msra.mxu0 %v1544
        %1670 = vmatprep.subr.mxu0 0.0
        %1671 = vmatpush2.msra.mxu0 %v1543
        %1672 = vmatprep.subr.mxu0 0.0
        %1673 = vmatpush2.msra.mxu0 %v1542
        %1674 = vmatprep.subr.mxu0 0.0
        %1675 = vmatpush2.msra.mxu0 %v1541
        %1676 = vmatprep.subr.mxu0 0.0
        %1677 = vmatpush2.msra.mxu0 %v1540
        %1678 = vmatprep.subr.mxu0 0.0
        %1679 = vmatpush2.msra.mxu0 %v1539
        %1680 = vmatprep.subr.mxu0 0.0
        %1681 = vmatpush2.msra.mxu0 %v1538
        %1682 = vmatprep.subr.mxu0 0.0
        %1683 = vmatpush2.msra.mxu0 %v1537
        %1684 = vmatprep.subr.mxu0 0.0
        %1685 = vmatpush2.msra.mxu0 %v1536
        %1686 = vmatprep.mubr.f32.mxu0 %v1487
        %1687 = vmatmul.mubr.f32.gmra.mxu0 %v1486
        %v1688 = vpop.f32.mrf.mxu0
        %v1689 = vadd.f32 %v1619, %v1688
        %v1690 = vpop.f32.mrf.mxu0
        %1691 = vdwg.mxu0
        %v1692 = vadd.f32 %v1483, %v1689
        %1693 = vst.msk [vmem:[%s269] sm:$0xff] %vm277, %v1692
        %s1694 = sand.u32 %s181, 1
        %s1695 = scalar_lea.sflag [#allocation4], %s1694
        %s1696 = sand.u32 %s181, 1
        %s1697 = smul.addr %s1696, 8
        %s1698 = scalar_lea.vmem [#allocation3], %s1697
        // Predicated region
        $region49: #{tpu_custom_call.1} parent=47 // pred_check
          %p1699 = pneg %p191
        $region50: #{tpu_custom_call.1} parent=47 // pred_check_branch
          %1701 = sbr.rel (%p1699) target = $region52
        $region51: #{tpu_custom_call.1} parent=47 // pred_region
          %s1703 = ssub.s32 128, 128
          %1704 = vsyncadd %s1695, %s1703
          %s1705 = smul.addr %s21, 128
          %s1706 = scalar_lea.hbm %s7, %s1705
          %s1708 = sshll.u32 %s1698, 4
          %s1709 = int_to_ptr.vmem [resolvable:$true] %s1708
          %1711 = dma.vmem_to_hbm [thread:$0]  %s1709, 128, %s1706, %s1695
        $region52: #{tpu_custom_call.1} parent=47 // pred_fallthru
          _
      $region48: #{tpu_custom_call.1} parent=5 // pred_fallthru
        _
      %p1712 = scmp.le.s32.totalorder 2, %s16
      // Predicated region
      $region53: #{tpu_custom_call.1} parent=5 // pred_check
        %p1713 = pneg %p1712
      $region54: #{tpu_custom_call.1} parent=5 // pred_check_branch
        %1715 = sbr.rel (%p1713) target = $region56
      $region55: #{tpu_custom_call.1} parent=5 // pred_region
        %s1716 = ssub.s32 %s16, 2
        // Predicated region
        $region57: #{tpu_custom_call.1} parent=55 // pred_check
          %p1717 = pneg %p197
        $region58: #{tpu_custom_call.1} parent=55 // pred_check_branch
          %1719 = sbr.rel (%p1717) target = $region60
        $region59: #{tpu_custom_call.1} parent=55 // pred_region
          %s1720 = sand.u32 %s182, 1
          %s1721 = scalar_lea.sflag [#allocation4], %s1720
          %s1722 = sand.u32 %s182, 1
          %s1723 = smul.addr %s1722, 8
          %s1724 = scalar_lea.vmem [#allocation3], %s1723
          %1725 = dma.done %s1721, 128
        $region60: #{tpu_custom_call.1} parent=55 // pred_fallthru
          _
      $region56: #{tpu_custom_call.1} parent=5 // pred_fallthru
        _
    $region6: #{tpu_custom_call.1} parent=1 // loop_footer
      %s20 = sadd.s32 1, %s16
    $region7: #{tpu_custom_call.1} parent=1 // loop_footer_branch
      %15 = sbr.rel target = $region3
    $region8: #{tpu_custom_call.1} parent=1 // loop_exit
      _
    %1726 = vsyncpa [#allocation4], 1
    %s1727 = scalar_lea.sflag [#allocation4], 1
    %1728 = vsyncpa %s1727, 1

</llo_original>
